<compile_context>
chip_gen: v7x
topology: tpu7x:2x2x1
jax: 0.10.0
libtpu: 0.0.40
codegen_flags: <defaults>
</compile_context>

<pallas_src>
import functools

import jax
import jax.numpy as jnp
from jax.experimental import pallas as pl
from jax.experimental.pallas import tpu as pltpu


# ----------------------------------------------------------------------------
# Fused ResidualGroup kernel: one grid step per (batch element, resblock)
# ----------------------------------------------------------------------------
def _group_kernel(x_ref, masks_ref,
                  w1_ref, b1_ref, w2_ref, b2_ref,
                  caw1_ref, cab1_ref, caw2_ref, cab2_ref,
                  wt_ref, bt_ref,
                  o_ref,
                  res_ref, patch_ref,
                  *, H, W, K, C):
    HW = H * W
    pad = K // 2
    r = pl.program_id(1)
    last_r = pl.num_programs(1) - 1

    # Per-image init of the resblock carry (VMEM scratch persists across grid).
    @pl.when(r == 0)
    def _():
        res_ref[...] = x_ref[0].astype(jnp.float32)

    masks = masks_ref[...]                                    # (K*K, HW) f32

    def conv(cur, wmat, bias):
        # Build the (K*K*C, HW) shifted-patch operand directly into the bf16
        # VMEM scratch (lane rolls on the XLU + precomputed boundary masks),
        # then one MXU matmul with contraction K*K*C and f32 accumulation.
        idx = 0
        for dy in range(-pad, pad + 1):
            for dx in range(-pad, pad + 1):
                off = dy * W + dx
                if off == 0:
                    tap = cur                                 # center tap: no mask
                else:
                    tap = pltpu.roll(cur, shift=(-off) % HW, axis=1) \
                          * masks[idx:idx + 1, :]
                patch_ref[pl.ds(idx * C, C), :] = tap.astype(jnp.bfloat16)
                idx += 1
        out = jnp.dot(wmat, patch_ref[...],
                      preferred_element_type=jnp.float32)     # (C, HW) f32
        return out + bias

    # ---- RCAB r: conv + ReLU, conv, channel attention, residual add --------
    res = res_ref[...]
    t = jnp.maximum(conv(res, w1_ref[0], b1_ref[0]), 0.0)
    t = conv(t, w2_ref[0], b2_ref[0])

    # Channel attention: global avg pool -> 1x1 -> ReLU -> 1x1 -> sigmoid.
    m = jnp.mean(t, axis=1, keepdims=True)                    # (C, 1) f32
    m_b = jnp.broadcast_to(m, (C, 128)).astype(jnp.bfloat16)
    h = jnp.maximum(
        jnp.dot(caw1_ref[0], m_b, preferred_element_type=jnp.float32)
        + cab1_ref[0], 0.0)                                   # (Cr, 128) f32
    y = jax.nn.sigmoid(
        jnp.dot(caw2_ref[0], h.astype(jnp.bfloat16),
                preferred_element_type=jnp.float32)
        + cab2_ref[0])                                        # (C, 128) f32
    new_res = t * y[:, 0:1] + res                             # CA scale + skip
    res_ref[...] = new_res

    # ---- Group tail: conv + outer residual, single lane-dense store --------
    @pl.when(r == last_r)
    def _():
        out = conv(new_res, wt_ref[...], bt_ref[...]) \
              + x_ref[0].astype(jnp.float32)
        o_ref[0] = out.astype(o_ref.dtype)


# ----------------------------------------------------------------------------
# Wrapper: pack weights (bf16, matmul-ready) and launch the fused call
# ----------------------------------------------------------------------------
def _conv_w_to_mat(w_hwio):
    """(K, K, Cin, Cout) HWIO conv weight -> (Cout, K*K*Cin) matmul operand."""
    K, _, Cin, Cout = w_hwio.shape
    return jnp.transpose(w_hwio, (3, 0, 1, 2)).reshape(Cout, K * K * Cin)


def _make_masks(H, W, K):
    """Boundary validity masks per (dy, dx) tap, host-precomputed: (K*K, H*W)."""
    pad = K // 2
    ii = jnp.arange(H * W, dtype=jnp.int32)
    wi = ii % W
    hi = ii // W
    rows = []
    for dy in range(-pad, pad + 1):
        for dx in range(-pad, pad + 1):
            valid = ((wi + dx >= 0) & (wi + dx < W) &
                     (hi + dy >= 0) & (hi + dy < H))
            rows.append(valid.astype(jnp.float32))
    return jnp.stack(rows)


def residual_group_forward(x, params):
    """x: (N, C, H, W) float32 — NCHW, same layout as the PyTorch module."""
    N, C, H, W = x.shape
    rcabs = params["rcabs"]
    R = len(rcabs)
    K = params["wt"].shape[0]
    Cr = rcabs[0]["ca_w1"].shape[1]
    HW = H * W
    KKC = K * K * C
    KK = K * K

    # TODO(synk): pad H*W (and extend the masks) when it is not a multiple of
    # 128 instead of using lane-misaligned slice+concat shifts.
    assert HW % 128 == 0, "kernel assumes lane dimension H*W % 128 == 0"

    bf16, f32 = jnp.bfloat16, jnp.float32
    # Per-resblock weight stacks; MXU operands pre-cast to bf16, biases f32.
    w1 = jnp.stack([_conv_w_to_mat(p["w1"]) for p in rcabs]).astype(bf16)    # (R,C,KKC)
    b1 = jnp.stack([p["b1"].reshape(C, 1) for p in rcabs]).astype(f32)       # (R,C,1)
    w2 = jnp.stack([_conv_w_to_mat(p["w2"]) for p in rcabs]).astype(bf16)
    b2 = jnp.stack([p["b2"].reshape(C, 1) for p in rcabs]).astype(f32)
    caw1 = jnp.stack([p["ca_w1"].T for p in rcabs]).astype(bf16)             # (R,Cr,C)
    cab1 = jnp.stack([p["ca_b1"].reshape(Cr, 1) for p in rcabs]).astype(f32)
    caw2 = jnp.stack([p["ca_w2"].T for p in rcabs]).astype(bf16)             # (R,C,Cr)
    cab2 = jnp.stack([p["ca_b2"].reshape(C, 1) for p in rcabs]).astype(f32)
    wt = _conv_w_to_mat(params["wt"]).astype(bf16)                           # (C,KKC)
    bt = params["bt"].reshape(C, 1).astype(f32)                              # (C,1)
    masks = _make_masks(H, W, K)                                             # (KK,HW)

    x2 = x.reshape(N, C, HW)            # contiguous NCHW -> (N, C, H*W), free

    kernel = functools.partial(_group_kernel, H=H, W=W, K=K, C=C)

    def const_spec(shape):
        # Whole array, constant index map -> fetched once, revisited.
        return pl.BlockSpec(shape, lambda n, r: (0,) * len(shape))

    def per_r_spec(full_shape):
        # One resblock's slice per r step -> weight DMA pipelined under compute.
        return pl.BlockSpec((1,) + tuple(full_shape[1:]),
                            lambda n, r: (r,) + (0,) * (len(full_shape) - 1))

    conv_flops = 2 * C * KKC * HW
    ca_flops = 2 * 2 * Cr * C * 128
    weight_bytes = sum(int(a.size) * a.dtype.itemsize for a in
                       (w1, b1, w2, b2, caw1, cab1, caw2, cab2, wt, bt, masks))
    cost = pl.CostEstimate(
        flops=N * (R * (2 * conv_flops + ca_flops) + conv_flops),
        transcendentals=N * R * C * 128,
        bytes_accessed=2 * int(x2.size) * 4 + weight_bytes)

    out2 = pl.pallas_call(
        kernel,
        out_shape=jax.ShapeDtypeStruct((N, C, HW), x.dtype),
        grid_spec=pltpu.PrefetchScalarGridSpec(
            num_scalar_prefetch=0,
            grid=(N, R),
            in_specs=[
                pl.BlockSpec((1, C, HW), lambda n, r: (n, 0, 0)),   # x (revisited over r)
                const_spec((KK, HW)),                               # boundary masks
                per_r_spec(w1.shape), per_r_spec(b1.shape),
                per_r_spec(w2.shape), per_r_spec(b2.shape),
                per_r_spec(caw1.shape), per_r_spec(cab1.shape),
                per_r_spec(caw2.shape), per_r_spec(cab2.shape),
                const_spec(wt.shape), const_spec(bt.shape),
            ],
            out_specs=pl.BlockSpec((1, C, HW), lambda n, r: (n, 0, 0)),
            scratch_shapes=[
                pltpu.VMEM((C, HW), jnp.float32),      # res carry across r
                pltpu.VMEM((KKC, HW), jnp.bfloat16),   # shifted-patch operand
            ]),
        compiler_params=pltpu.CompilerParams(
            dimension_semantics=("parallel", "arbitrary")),
        cost_estimate=cost,
    )(x2, masks, w1, b1, w2, b2, caw1, cab1, caw2, cab2, wt, bt)
    return out2.reshape(N, C, H, W)


# ----------------------------------------------------------------------------
# Pure-JAX reference (NCHW, matches the PyTorch module; f32 throughout)
# ----------------------------------------------------------------------------
def _conv_ref(x, w, b):
    y = jax.lax.conv_general_dilated(
        x, w, window_strides=(1, 1), padding="SAME",
        dimension_numbers=("NCHW", "HWIO", "NCHW"))
    return y + b.reshape(1, -1, 1, 1)


def residual_group_ref(x, params):
    res = x
    for p in params["rcabs"]:
        t = jnp.maximum(_conv_ref(res, p["w1"], p["b1"]), 0.0)
        t = _conv_ref(t, p["w2"], p["b2"])
        mean = jnp.mean(t, axis=(2, 3))                                 # (N, C)
        h = jnp.maximum(mean @ p["ca_w1"] + p["ca_b1"], 0.0)
        y = jax.nn.sigmoid(h @ p["ca_w2"] + p["ca_b2"])                 # (N, C)
        res = t * y[:, :, None, None] + res
    return _conv_ref(res, params["wt"], params["bt"]) + x


# ----------------------------------------------------------------------------
# Deterministic parameter construction
# ----------------------------------------------------------------------------
def make_params(key, n_feat, kernel_size, reduction, n_resblocks):
    C, K, Cr = n_feat, kernel_size, n_feat // reduction
    rcabs = []
    for _ in range(n_resblocks):
        key, *ks = jax.random.split(key, 9)
        rcabs.append({
            "w1": 0.05 * jax.random.normal(ks[0], (K, K, C, C), jnp.float32),
            "b1": 0.05 * jax.random.normal(ks[1], (C,), jnp.float32),
            "w2": 0.05 * jax.random.normal(ks[2], (K, K, C, C), jnp.float32),
            "b2": 0.05 * jax.random.normal(ks[3], (C,), jnp.float32),
            "ca_w1": 0.05 * jax.random.normal(ks[4], (C, Cr), jnp.float32),
            "ca_b1": 0.05 * jax.random.normal(ks[5], (Cr,), jnp.float32),
            "ca_w2": 0.05 * jax.random.normal(ks[6], (Cr, C), jnp.float32),
            "ca_b2": 0.05 * jax.random.normal(ks[7], (C,), jnp.float32),
        })
    key, k1, k2 = jax.random.split(key, 3)
    return {
        "rcabs": rcabs,
        "wt": 0.05 * jax.random.normal(k1, (K, K, C, C), jnp.float32),
        "bt": 0.05 * jax.random.normal(k2, (C,), jnp.float32),
    }


if __name__ == "__main__":
    # Small shapes consistent with the module: NCHW input, n_feat channels.
    N, H, W = 2, 16, 16
    n_feat, kernel_size, reduction, n_resblocks = 16, 3, 4, 2

    key = jax.random.PRNGKey(0)
    key, kx = jax.random.split(key)
    x = jax.random.normal(kx, (N, n_feat, H, W), jnp.float32)   # NCHW like PyTorch
    params = make_params(key, n_feat, kernel_size, reduction, n_resblocks)

    out = jax.block_until_ready(residual_group_forward(x, params))
    ref = residual_group_ref(x, params)

    assert out.shape == (N, n_feat, H, W)
    # Dot operands are bf16 (f32 accumulation); tolerance loosened accordingly.
    assert jnp.allclose(out, ref, rtol=3e-2, atol=3e-2), "mismatch vs reference"

    print("KERNEL_OK")
</pallas_src>

<mosaic_0001>
module attributes {stable_mosaic.version = 11 : i64} {
  func.func @_group_kernel(%arg0: i32, %arg1: i32, %arg2: memref<1x16x256xf32, #tpu.memory_space<vmem>>, %arg3: memref<9x256xf32, #tpu.memory_space<vmem>>, %arg4: memref<1x16x144xbf16, #tpu.memory_space<vmem>>, %arg5: memref<1x16x1xf32, #tpu.memory_space<vmem>>, %arg6: memref<1x16x144xbf16, #tpu.memory_space<vmem>>, %arg7: memref<1x16x1xf32, #tpu.memory_space<vmem>>, %arg8: memref<1x4x16xbf16, #tpu.memory_space<vmem>>, %arg9: memref<1x4x1xf32, #tpu.memory_space<vmem>>, %arg10: memref<1x16x4xbf16, #tpu.memory_space<vmem>>, %arg11: memref<1x16x1xf32, #tpu.memory_space<vmem>>, %arg12: memref<16x144xbf16, #tpu.memory_space<vmem>>, %arg13: memref<16x1xf32, #tpu.memory_space<vmem>>, %arg14: memref<1x16x256xf32, #tpu.memory_space<vmem>>, %arg15: memref<16x256xf32, #tpu.memory_space<vmem>>, %arg16: memref<144x256xbf16, #tpu.memory_space<vmem>>) attributes {dimension_semantics = [#tpu.dimension_semantics<parallel>, #tpu.dimension_semantics<arbitrary>], iteration_bounds = array<i64: 2, 2>, scalar_prefetch = 0 : i64, scratch_operands = 2 : i64, tpu.core_type = #tpu.core_type<tc>, window_params = [{transform_indices = @transform_0, window_bounds = array<i64: 1, 16, 256>}, {pipeline_mode = #tpu.pipeline_mode<synchronous>, transform_indices = @transform_1, window_bounds = array<i64: 9, 256>}, {transform_indices = @transform_2, window_bounds = array<i64: 1, 16, 144>}, {transform_indices = @transform_3, window_bounds = array<i64: 1, 16, 1>}, {transform_indices = @transform_4, window_bounds = array<i64: 1, 16, 144>}, {transform_indices = @transform_5, window_bounds = array<i64: 1, 16, 1>}, {transform_indices = @transform_6, window_bounds = array<i64: 1, 4, 16>}, {transform_indices = @transform_7, window_bounds = array<i64: 1, 4, 1>}, {transform_indices = @transform_8, window_bounds = array<i64: 1, 16, 4>}, {transform_indices = @transform_9, window_bounds = array<i64: 1, 16, 1>}, {pipeline_mode = #tpu.pipeline_mode<synchronous>, transform_indices = @transform_10, window_bounds = array<i64: 16, 144>}, {pipeline_mode = #tpu.pipeline_mode<synchronous>, transform_indices = @transform_11, window_bounds = array<i64: 16, 1>}, {transform_indices = @transform_12, window_bounds = array<i64: 1, 16, 256>}]} {
    %c0_i32 = arith.constant 0 : i32
    %0 = arith.cmpi eq, %arg1, %c0_i32 : i32
    %1 = arith.extui %0 : i1 to i32
    %c0_i32_0 = arith.constant 0 : i32
    %2 = arith.cmpi ne, %1, %c0_i32_0 : i32
    scf.if %2 {
      %c0_80 = arith.constant 0 : index
      %c0_81 = arith.constant 0 : index
      %c0_82 = arith.constant 0 : index
      %160 = vector.load %arg2[%c0_80, %c0_81, %c0_82] : memref<1x16x256xf32, #tpu.memory_space<vmem>>, vector<1x16x256xf32>
      %161 = vector.shape_cast %160 : vector<1x16x256xf32> to vector<16x256xf32>
      %c0_83 = arith.constant 0 : index
      %c0_84 = arith.constant 0 : index
      %162 = vector.load %arg15[%c0_83, %c0_84] : memref<16x256xf32, #tpu.memory_space<vmem>>, vector<16x256xf32>
      tpu.vector_store %arg15[%c0_83, %c0_84], %161 {strides = array<i32>} : memref<16x256xf32, #tpu.memory_space<vmem>>, vector<16x256xf32>,
    } else {
    }
    %c0 = arith.constant 0 : index
    %c0_1 = arith.constant 0 : index
    %3 = vector.load %arg3[%c0, %c0_1] : memref<9x256xf32, #tpu.memory_space<vmem>>, vector<9x256xf32>
    %c0_2 = arith.constant 0 : index
    %c0_3 = arith.constant 0 : index
    %4 = vector.load %arg15[%c0_2, %c0_3] : memref<16x256xf32, #tpu.memory_space<vmem>>, vector<16x256xf32>
    %c0_4 = arith.constant 0 : index
    %c0_5 = arith.constant 0 : index
    %c0_6 = arith.constant 0 : index
    %5 = vector.load %arg4[%c0_4, %c0_5, %c0_6] : memref<1x16x144xbf16, #tpu.memory_space<vmem>>, vector<1x16x144xbf16>
    %6 = vector.shape_cast %5 : vector<1x16x144xbf16> to vector<16x144xbf16>
    %c0_7 = arith.constant 0 : index
    %c0_8 = arith.constant 0 : index
    %c0_9 = arith.constant 0 : index
    %7 = vector.load %arg5[%c0_7, %c0_8, %c0_9] : memref<1x16x1xf32, #tpu.memory_space<vmem>>, vector<1x16x1xf32>
    %8 = vector.shape_cast %7 : vector<1x16x1xf32> to vector<16x1xf32>
    %c17_i32 = arith.constant 17 : i32
    %9 = tpu.dynamic_rotate %4 by %c17_i32 dim 1 : vector<16x256xf32>, i32 -> vector<16x256xf32>
    %10 = vector.extract_strided_slice %3 {offsets = [0, 0], sizes = [1, 256], strides = [1, 1]} : vector<9x256xf32> to vector<1x256xf32>
    %11 = vector.broadcast %10 : vector<1x256xf32> to vector<16x256xf32>
    %12 = arith.mulf %9, %11 : vector<16x256xf32>
    %13 = arith.truncf %12 : vector<16x256xf32> to vector<16x256xbf16>
    %c0_10 = arith.constant 0 : index
    %c0_11 = arith.constant 0 : index
    %14 = vector.load %arg16[%c0_10, %c0_11] : memref<144x256xbf16, #tpu.memory_space<vmem>>, vector<16x256xbf16>
    tpu.vector_store %arg16[%c0_10, %c0_11], %13 {strides = array<i32>} : memref<144x256xbf16, #tpu.memory_space<vmem>>, vector<16x256xbf16>,
    %c16_i32 = arith.constant 16 : i32
    %15 = tpu.dynamic_rotate %4 by %c16_i32 dim 1 : vector<16x256xf32>, i32 -> vector<16x256xf32>
    %16 = vector.extract_strided_slice %3 {offsets = [1, 0], sizes = [1, 256], strides = [1, 1]} : vector<9x256xf32> to vector<1x256xf32>
    %17 = vector.broadcast %16 : vector<1x256xf32> to vector<16x256xf32>
    %18 = arith.mulf %15, %17 : vector<16x256xf32>
    %19 = arith.truncf %18 : vector<16x256xf32> to vector<16x256xbf16>
    %c16 = arith.constant 16 : index
    %c0_12 = arith.constant 0 : index
    %20 = vector.load %arg16[%c16, %c0_12] : memref<144x256xbf16, #tpu.memory_space<vmem>>, vector<16x256xbf16>
    tpu.vector_store %arg16[%c16, %c0_12], %19 {strides = array<i32>} : memref<144x256xbf16, #tpu.memory_space<vmem>>, vector<16x256xbf16>,
    %c15_i32 = arith.constant 15 : i32
    %21 = tpu.dynamic_rotate %4 by %c15_i32 dim 1 : vector<16x256xf32>, i32 -> vector<16x256xf32>
    %22 = vector.extract_strided_slice %3 {offsets = [2, 0], sizes = [1, 256], strides = [1, 1]} : vector<9x256xf32> to vector<1x256xf32>
    %23 = vector.broadcast %22 : vector<1x256xf32> to vector<16x256xf32>
    %24 = arith.mulf %21, %23 : vector<16x256xf32>
    %25 = arith.truncf %24 : vector<16x256xf32> to vector<16x256xbf16>
    %c32 = arith.constant 32 : index
    %c0_13 = arith.constant 0 : index
    %26 = vector.load %arg16[%c32, %c0_13] : memref<144x256xbf16, #tpu.memory_space<vmem>>, vector<16x256xbf16>
    tpu.vector_store %arg16[%c32, %c0_13], %25 {strides = array<i32>} : memref<144x256xbf16, #tpu.memory_space<vmem>>, vector<16x256xbf16>,
    %c1_i32 = arith.constant 1 : i32
    %27 = tpu.dynamic_rotate %4 by %c1_i32 dim 1 : vector<16x256xf32>, i32 -> vector<16x256xf32>
    %28 = vector.extract_strided_slice %3 {offsets = [3, 0], sizes = [1, 256], strides = [1, 1]} : vector<9x256xf32> to vector<1x256xf32>
    %29 = vector.broadcast %28 : vector<1x256xf32> to vector<16x256xf32>
    %30 = arith.mulf %27, %29 : vector<16x256xf32>
    %31 = arith.truncf %30 : vector<16x256xf32> to vector<16x256xbf16>
    %c48 = arith.constant 48 : index
    %c0_14 = arith.constant 0 : index
    %32 = vector.load %arg16[%c48, %c0_14] : memref<144x256xbf16, #tpu.memory_space<vmem>>, vector<16x256xbf16>
    tpu.vector_store %arg16[%c48, %c0_14], %31 {strides = array<i32>} : memref<144x256xbf16, #tpu.memory_space<vmem>>, vector<16x256xbf16>,
    %33 = arith.truncf %4 : vector<16x256xf32> to vector<16x256xbf16>
    %c64 = arith.constant 64 : index
    %c0_15 = arith.constant 0 : index
    %34 = vector.load %arg16[%c64, %c0_15] : memref<144x256xbf16, #tpu.memory_space<vmem>>, vector<16x256xbf16>
    tpu.vector_store %arg16[%c64, %c0_15], %33 {strides = array<i32>} : memref<144x256xbf16, #tpu.memory_space<vmem>>, vector<16x256xbf16>,
    %c255_i32 = arith.constant 255 : i32
    %35 = tpu.dynamic_rotate %4 by %c255_i32 dim 1 : vector<16x256xf32>, i32 -> vector<16x256xf32>
    %36 = vector.extract_strided_slice %3 {offsets = [5, 0], sizes = [1, 256], strides = [1, 1]} : vector<9x256xf32> to vector<1x256xf32>
    %37 = vector.broadcast %36 : vector<1x256xf32> to vector<16x256xf32>
    %38 = arith.mulf %35, %37 : vector<16x256xf32>
    %39 = arith.truncf %38 : vector<16x256xf32> to vector<16x256xbf16>
    %c80 = arith.constant 80 : index
    %c0_16 = arith.constant 0 : index
    %40 = vector.load %arg16[%c80, %c0_16] : memref<144x256xbf16, #tpu.memory_space<vmem>>, vector<16x256xbf16>
    tpu.vector_store %arg16[%c80, %c0_16], %39 {strides = array<i32>} : memref<144x256xbf16, #tpu.memory_space<vmem>>, vector<16x256xbf16>,
    %c241_i32 = arith.constant 241 : i32
    %41 = tpu.dynamic_rotate %4 by %c241_i32 dim 1 : vector<16x256xf32>, i32 -> vector<16x256xf32>
    %42 = vector.extract_strided_slice %3 {offsets = [6, 0], sizes = [1, 256], strides = [1, 1]} : vector<9x256xf32> to vector<1x256xf32>
    %43 = vector.broadcast %42 : vector<1x256xf32> to vector<16x256xf32>
    %44 = arith.mulf %41, %43 : vector<16x256xf32>
    %45 = arith.truncf %44 : vector<16x256xf32> to vector<16x256xbf16>
    %c96 = arith.constant 96 : index
    %c0_17 = arith.constant 0 : index
    %46 = vector.load %arg16[%c96, %c0_17] : memref<144x256xbf16, #tpu.memory_space<vmem>>, vector<16x256xbf16>
    tpu.vector_store %arg16[%c96, %c0_17], %45 {strides = array<i32>} : memref<144x256xbf16, #tpu.memory_space<vmem>>, vector<16x256xbf16>,
    %c240_i32 = arith.constant 240 : i32
    %47 = tpu.dynamic_rotate %4 by %c240_i32 dim 1 : vector<16x256xf32>, i32 -> vector<16x256xf32>
    %48 = vector.extract_strided_slice %3 {offsets = [7, 0], sizes = [1, 256], strides = [1, 1]} : vector<9x256xf32> to vector<1x256xf32>
    %49 = vector.broadcast %48 : vector<1x256xf32> to vector<16x256xf32>
    %50 = arith.mulf %47, %49 : vector<16x256xf32>
    %51 = arith.truncf %50 : vector<16x256xf32> to vector<16x256xbf16>
    %c112 = arith.constant 112 : index
    %c0_18 = arith.constant 0 : index
    %52 = vector.load %arg16[%c112, %c0_18] : memref<144x256xbf16, #tpu.memory_space<vmem>>, vector<16x256xbf16>
    tpu.vector_store %arg16[%c112, %c0_18], %51 {strides = array<i32>} : memref<144x256xbf16, #tpu.memory_space<vmem>>, vector<16x256xbf16>,
    %c239_i32 = arith.constant 239 : i32
    %53 = tpu.dynamic_rotate %4 by %c239_i32 dim 1 : vector<16x256xf32>, i32 -> vector<16x256xf32>
    %54 = vector.extract_strided_slice %3 {offsets = [8, 0], sizes = [1, 256], strides = [1, 1]} : vector<9x256xf32> to vector<1x256xf32>
    %55 = vector.broadcast %54 : vector<1x256xf32> to vector<16x256xf32>
    %56 = arith.mulf %53, %55 : vector<16x256xf32>
    %57 = arith.truncf %56 : vector<16x256xf32> to vector<16x256xbf16>
    %c128 = arith.constant 128 : index
    %c0_19 = arith.constant 0 : index
    %58 = vector.load %arg16[%c128, %c0_19] : memref<144x256xbf16, #tpu.memory_space<vmem>>, vector<16x256xbf16>
    tpu.vector_store %arg16[%c128, %c0_19], %57 {strides = array<i32>} : memref<144x256xbf16, #tpu.memory_space<vmem>>, vector<16x256xbf16>,
    %c0_20 = arith.constant 0 : index
    %c0_21 = arith.constant 0 : index
    %59 = vector.load %arg16[%c0_20, %c0_21] : memref<144x256xbf16, #tpu.memory_space<vmem>>, vector<144x256xbf16>
    %cst = arith.constant dense<0.000000e+00> : vector<16x256xf32>
    %60 = tpu.matmul %6, %59, %cst {dimension_numbers = #tpu.dot_dimension_numbers<[1], [0], [0], [1], [0, 0, 1, 1], [], []>} : vector<16x144xbf16>, vector<144x256xbf16>, vector<16x256xf32> -> vector<16x256xf32>
    %61 = vector.broadcast %8 : vector<16x1xf32> to vector<16x256xf32>
    %62 = arith.addf %60, %61 : vector<16x256xf32>
    %cst_22 = arith.constant 0.000000e+00 : f32
    %63 = vector.broadcast %cst_22 : f32 to vector<16x256xf32>
    %64 = arith.maximumf %62, %63 : vector<16x256xf32>
    %c0_23 = arith.constant 0 : index
    %c0_24 = arith.constant 0 : index
    %c0_25 = arith.constant 0 : index
    %65 = vector.load %arg6[%c0_23, %c0_24, %c0_25] : memref<1x16x144xbf16, #tpu.memory_space<vmem>>, vector<1x16x144xbf16>
    %66 = vector.shape_cast %65 : vector<1x16x144xbf16> to vector<16x144xbf16>
    %c0_26 = arith.constant 0 : index
    %c0_27 = arith.constant 0 : index
    %c0_28 = arith.constant 0 : index
    %67 = vector.load %arg7[%c0_26, %c0_27, %c0_28] : memref<1x16x1xf32, #tpu.memory_space<vmem>>, vector<1x16x1xf32>
    %68 = vector.shape_cast %67 : vector<1x16x1xf32> to vector<16x1xf32>
    %c17_i32_29 = arith.constant 17 : i32
    %69 = tpu.dynamic_rotate %64 by %c17_i32_29 dim 1 : vector<16x256xf32>, i32 -> vector<16x256xf32>
    %70 = vector.extract_strided_slice %3 {offsets = [0, 0], sizes = [1, 256], strides = [1, 1]} : vector<9x256xf32> to vector<1x256xf32>
    %71 = vector.broadcast %70 : vector<1x256xf32> to vector<16x256xf32>
    %72 = arith.mulf %69, %71 : vector<16x256xf32>
    %73 = arith.truncf %72 : vector<16x256xf32> to vector<16x256xbf16>
    %c0_30 = arith.constant 0 : index
    %c0_31 = arith.constant 0 : index
    %74 = vector.load %arg16[%c0_30, %c0_31] : memref<144x256xbf16, #tpu.memory_space<vmem>>, vector<16x256xbf16>
    tpu.vector_store %arg16[%c0_30, %c0_31], %73 {strides = array<i32>} : memref<144x256xbf16, #tpu.memory_space<vmem>>, vector<16x256xbf16>,
    %c16_i32_32 = arith.constant 16 : i32
    %75 = tpu.dynamic_rotate %64 by %c16_i32_32 dim 1 : vector<16x256xf32>, i32 -> vector<16x256xf32>
    %76 = vector.extract_strided_slice %3 {offsets = [1, 0], sizes = [1, 256], strides = [1, 1]} : vector<9x256xf32> to vector<1x256xf32>
    %77 = vector.broadcast %76 : vector<1x256xf32> to vector<16x256xf32>
    %78 = arith.mulf %75, %77 : vector<16x256xf32>
    %79 = arith.truncf %78 : vector<16x256xf32> to vector<16x256xbf16>
    %c16_33 = arith.constant 16 : index
    %c0_34 = arith.constant 0 : index
    %80 = vector.load %arg16[%c16_33, %c0_34] : memref<144x256xbf16, #tpu.memory_space<vmem>>, vector<16x256xbf16>
    tpu.vector_store %arg16[%c16_33, %c0_34], %79 {strides = array<i32>} : memref<144x256xbf16, #tpu.memory_space<vmem>>, vector<16x256xbf16>,
    %c15_i32_35 = arith.constant 15 : i32
    %81 = tpu.dynamic_rotate %64 by %c15_i32_35 dim 1 : vector<16x256xf32>, i32 -> vector<16x256xf32>
    %82 = vector.extract_strided_slice %3 {offsets = [2, 0], sizes = [1, 256], strides = [1, 1]} : vector<9x256xf32> to vector<1x256xf32>
    %83 = vector.broadcast %82 : vector<1x256xf32> to vector<16x256xf32>
    %84 = arith.mulf %81, %83 : vector<16x256xf32>
    %85 = arith.truncf %84 : vector<16x256xf32> to vector<16x256xbf16>
    %c32_36 = arith.constant 32 : index
    %c0_37 = arith.constant 0 : index
    %86 = vector.load %arg16[%c32_36, %c0_37] : memref<144x256xbf16, #tpu.memory_space<vmem>>, vector<16x256xbf16>
    tpu.vector_store %arg16[%c32_36, %c0_37], %85 {strides = array<i32>} : memref<144x256xbf16, #tpu.memory_space<vmem>>, vector<16x256xbf16>,
    %c1_i32_38 = arith.constant 1 : i32
    %87 = tpu.dynamic_rotate %64 by %c1_i32_38 dim 1 : vector<16x256xf32>, i32 -> vector<16x256xf32>
    %88 = vector.extract_strided_slice %3 {offsets = [3, 0], sizes = [1, 256], strides = [1, 1]} : vector<9x256xf32> to vector<1x256xf32>
    %89 = vector.broadcast %88 : vector<1x256xf32> to vector<16x256xf32>
    %90 = arith.mulf %87, %89 : vector<16x256xf32>
    %91 = arith.truncf %90 : vector<16x256xf32> to vector<16x256xbf16>
    %c48_39 = arith.constant 48 : index
    %c0_40 = arith.constant 0 : index
    %92 = vector.load %arg16[%c48_39, %c0_40] : memref<144x256xbf16, #tpu.memory_space<vmem>>, vector<16x256xbf16>
    tpu.vector_store %arg16[%c48_39, %c0_40], %91 {strides = array<i32>} : memref<144x256xbf16, #tpu.memory_space<vmem>>, vector<16x256xbf16>,
    %93 = arith.truncf %64 : vector<16x256xf32> to vector<16x256xbf16>
    %c64_41 = arith.constant 64 : index
    %c0_42 = arith.constant 0 : index
    %94 = vector.load %arg16[%c64_41, %c0_42] : memref<144x256xbf16, #tpu.memory_space<vmem>>, vector<16x256xbf16>
    tpu.vector_store %arg16[%c64_41, %c0_42], %93 {strides = array<i32>} : memref<144x256xbf16, #tpu.memory_space<vmem>>, vector<16x256xbf16>,
    %c255_i32_43 = arith.constant 255 : i32
    %95 = tpu.dynamic_rotate %64 by %c255_i32_43 dim 1 : vector<16x256xf32>, i32 -> vector<16x256xf32>
    %96 = vector.extract_strided_slice %3 {offsets = [5, 0], sizes = [1, 256], strides = [1, 1]} : vector<9x256xf32> to vector<1x256xf32>
    %97 = vector.broadcast %96 : vector<1x256xf32> to vector<16x256xf32>
    %98 = arith.mulf %95, %97 : vector<16x256xf32>
    %99 = arith.truncf %98 : vector<16x256xf32> to vector<16x256xbf16>
    %c80_44 = arith.constant 80 : index
    %c0_45 = arith.constant 0 : index
    %100 = vector.load %arg16[%c80_44, %c0_45] : memref<144x256xbf16, #tpu.memory_space<vmem>>, vector<16x256xbf16>
    tpu.vector_store %arg16[%c80_44, %c0_45], %99 {strides = array<i32>} : memref<144x256xbf16, #tpu.memory_space<vmem>>, vector<16x256xbf16>,
    %c241_i32_46 = arith.constant 241 : i32
    %101 = tpu.dynamic_rotate %64 by %c241_i32_46 dim 1 : vector<16x256xf32>, i32 -> vector<16x256xf32>
    %102 = vector.extract_strided_slice %3 {offsets = [6, 0], sizes = [1, 256], strides = [1, 1]} : vector<9x256xf32> to vector<1x256xf32>
    %103 = vector.broadcast %102 : vector<1x256xf32> to vector<16x256xf32>
    %104 = arith.mulf %101, %103 : vector<16x256xf32>
    %105 = arith.truncf %104 : vector<16x256xf32> to vector<16x256xbf16>
    %c96_47 = arith.constant 96 : index
    %c0_48 = arith.constant 0 : index
    %106 = vector.load %arg16[%c96_47, %c0_48] : memref<144x256xbf16, #tpu.memory_space<vmem>>, vector<16x256xbf16>
    tpu.vector_store %arg16[%c96_47, %c0_48], %105 {strides = array<i32>} : memref<144x256xbf16, #tpu.memory_space<vmem>>, vector<16x256xbf16>,
    %c240_i32_49 = arith.constant 240 : i32
    %107 = tpu.dynamic_rotate %64 by %c240_i32_49 dim 1 : vector<16x256xf32>, i32 -> vector<16x256xf32>
    %108 = vector.extract_strided_slice %3 {offsets = [7, 0], sizes = [1, 256], strides = [1, 1]} : vector<9x256xf32> to vector<1x256xf32>
    %109 = vector.broadcast %108 : vector<1x256xf32> to vector<16x256xf32>
    %110 = arith.mulf %107, %109 : vector<16x256xf32>
    %111 = arith.truncf %110 : vector<16x256xf32> to vector<16x256xbf16>
    %c112_50 = arith.constant 112 : index
    %c0_51 = arith.constant 0 : index
    %112 = vector.load %arg16[%c112_50, %c0_51] : memref<144x256xbf16, #tpu.memory_space<vmem>>, vector<16x256xbf16>
    tpu.vector_store %arg16[%c112_50, %c0_51], %111 {strides = array<i32>} : memref<144x256xbf16, #tpu.memory_space<vmem>>, vector<16x256xbf16>,
    %c239_i32_52 = arith.constant 239 : i32
    %113 = tpu.dynamic_rotate %64 by %c239_i32_52 dim 1 : vector<16x256xf32>, i32 -> vector<16x256xf32>
    %114 = vector.extract_strided_slice %3 {offsets = [8, 0], sizes = [1, 256], strides = [1, 1]} : vector<9x256xf32> to vector<1x256xf32>
    %115 = vector.broadcast %114 : vector<1x256xf32> to vector<16x256xf32>
    %116 = arith.mulf %113, %115 : vector<16x256xf32>
    %117 = arith.truncf %116 : vector<16x256xf32> to vector<16x256xbf16>
    %c128_53 = arith.constant 128 : index
    %c0_54 = arith.constant 0 : index
    %118 = vector.load %arg16[%c128_53, %c0_54] : memref<144x256xbf16, #tpu.memory_space<vmem>>, vector<16x256xbf16>
    tpu.vector_store %arg16[%c128_53, %c0_54], %117 {strides = array<i32>} : memref<144x256xbf16, #tpu.memory_space<vmem>>, vector<16x256xbf16>,
    %c0_55 = arith.constant 0 : index
    %c0_56 = arith.constant 0 : index
    %119 = vector.load %arg16[%c0_55, %c0_56] : memref<144x256xbf16, #tpu.memory_space<vmem>>, vector<144x256xbf16>
    %cst_57 = arith.constant dense<0.000000e+00> : vector<16x256xf32>
    %120 = tpu.matmul %66, %119, %cst_57 {dimension_numbers = #tpu.dot_dimension_numbers<[1], [0], [0], [1], [0, 0, 1, 1], [], []>} : vector<16x144xbf16>, vector<144x256xbf16>, vector<16x256xf32> -> vector<16x256xf32>
    %121 = vector.broadcast %68 : vector<16x1xf32> to vector<16x256xf32>
    %122 = arith.addf %120, %121 : vector<16x256xf32>
    %cst_58 = arith.constant dense<0.000000e+00> : vector<16xf32>
    %123 = vector.multi_reduction <add>, %122, %cst_58 [1] : vector<16x256xf32> to vector<16xf32>
    %124 = vector.shape_cast %123 : vector<16xf32> to vector<16x1xf32>
    %cst_59 = arith.constant 2.560000e+02 : f32
    %125 = vector.broadcast %cst_59 : f32 to vector<16x1xf32>
    %126 = arith.divf %124, %125 : vector<16x1xf32>
    %127 = vector.shape_cast %126 : vector<16x1xf32> to vector<16x1xf32>
    %128 = vector.broadcast %127 : vector<16x1xf32> to vector<16x128xf32>
    %129 = arith.truncf %128 : vector<16x128xf32> to vector<16x128xbf16>
    %c0_60 = arith.constant 0 : index
    %c0_61 = arith.constant 0 : index
    %c0_62 = arith.constant 0 : index
    %130 = vector.load %arg8[%c0_60, %c0_61, %c0_62] : memref<1x4x16xbf16, #tpu.memory_space<vmem>>, vector<1x4x16xbf16>
    %131 = vector.shape_cast %130 : vector<1x4x16xbf16> to vector<4x16xbf16>
    %cst_63 = arith.constant dense<0.000000e+00> : vector<4x128xf32>
    %132 = tpu.matmul %131, %129, %cst_63 {dimension_numbers = #tpu.dot_dimension_numbers<[1], [0], [0], [1], [0, 0, 1, 1], [], []>} : vector<4x16xbf16>, vector<16x128xbf16>, vector<4x128xf32> -> vector<4x128xf32>
    %c0_64 = arith.constant 0 : index
    %c0_65 = arith.constant 0 : index
    %c0_66 = arith.constant 0 : index
    %133 = vector.load %arg9[%c0_64, %c0_65, %c0_66] : memref<1x4x1xf32, #tpu.memory_space<vmem>>, vector<1x4x1xf32>
    %134 = vector.shape_cast %133 : vector<1x4x1xf32> to vector<4x1xf32>
    %135 = vector.broadcast %134 : vector<4x1xf32> to vector<4x128xf32>
    %136 = arith.addf %132, %135 : vector<4x128xf32>
    %cst_67 = arith.constant 0.000000e+00 : f32
    %137 = vector.broadcast %cst_67 : f32 to vector<4x128xf32>
    %138 = arith.maximumf %136, %137 : vector<4x128xf32>
    %c0_68 = arith.constant 0 : index
    %c0_69 = arith.constant 0 : index
    %c0_70 = arith.constant 0 : index
    %139 = vector.load %arg10[%c0_68, %c0_69, %c0_70] : memref<1x16x4xbf16, #tpu.memory_space<vmem>>, vector<1x16x4xbf16>
    %140 = vector.shape_cast %139 : vector<1x16x4xbf16> to vector<16x4xbf16>
    %141 = arith.truncf %138 : vector<4x128xf32> to vector<4x128xbf16>
    %cst_71 = arith.constant dense<0.000000e+00> : vector<16x128xf32>
    %142 = tpu.matmul %140, %141, %cst_71 {dimension_numbers = #tpu.dot_dimension_numbers<[1], [0], [0], [1], [0, 0, 1, 1], [], []>} : vector<16x4xbf16>, vector<4x128xbf16>, vector<16x128xf32> -> vector<16x128xf32>
    %c0_72 = arith.constant 0 : index
    %c0_73 = arith.constant 0 : index
    %c0_74 = arith.constant 0 : index
    %143 = vector.load %arg11[%c0_72, %c0_73, %c0_74] : memref<1x16x1xf32, #tpu.memory_space<vmem>>, vector<1x16x1xf32>
    %144 = vector.shape_cast %143 : vector<1x16x1xf32> to vector<16x1xf32>
    %145 = vector.broadcast %144 : vector<16x1xf32> to vector<16x128xf32>
    %146 = arith.addf %142, %145 : vector<16x128xf32>
    %147 = arith.negf %146 : vector<16x128xf32>
    %148 = math.exp %147 : vector<16x128xf32>
    %cst_75 = arith.constant 1.000000e+00 : f32
    %149 = vector.broadcast %cst_75 : f32 to vector<16x128xf32>
    %150 = arith.addf %149, %148 : vector<16x128xf32>
    %151 = arith.divf %149, %150 : vector<16x128xf32>
    %152 = vector.extract_strided_slice %151 {offsets = [0, 0], sizes = [16, 1], strides = [1, 1]} : vector<16x128xf32> to vector<16x1xf32>
    %153 = vector.broadcast %152 : vector<16x1xf32> to vector<16x256xf32>
    %154 = arith.mulf %122, %153 : vector<16x256xf32>
    %155 = arith.addf %154, %4 : vector<16x256xf32>
    %c0_76 = arith.constant 0 : index
    %c0_77 = arith.constant 0 : index
    %156 = vector.load %arg15[%c0_76, %c0_77] : memref<16x256xf32, #tpu.memory_space<vmem>>, vector<16x256xf32>
    tpu.vector_store %arg15[%c0_76, %c0_77], %155 {strides = array<i32>} : memref<16x256xf32, #tpu.memory_space<vmem>>, vector<16x256xf32>,
    %c1_i32_78 = arith.constant 1 : i32
    %157 = arith.cmpi eq, %arg1, %c1_i32_78 : i32
    %158 = arith.extui %157 : i1 to i32
    %c0_i32_79 = arith.constant 0 : i32
    %159 = arith.cmpi ne, %158, %c0_i32_79 : i32
    scf.if %159 {
      %c0_80 = arith.constant 0 : index
      %c0_81 = arith.constant 0 : index
      %160 = vector.load %arg12[%c0_80, %c0_81] : memref<16x144xbf16, #tpu.memory_space<vmem>>, vector<16x144xbf16>
      %c0_82 = arith.constant 0 : index
      %c0_83 = arith.constant 0 : index
      %161 = vector.load %arg13[%c0_82, %c0_83] : memref<16x1xf32, #tpu.memory_space<vmem>>, vector<16x1xf32>
      %c17_i32_84 = arith.constant 17 : i32
      %162 = tpu.dynamic_rotate %155 by %c17_i32_84 dim 1 : vector<16x256xf32>, i32 -> vector<16x256xf32>
      %163 = vector.extract_strided_slice %3 {offsets = [0, 0], sizes = [1, 256], strides = [1, 1]} : vector<9x256xf32> to vector<1x256xf32>
      %164 = vector.broadcast %163 : vector<1x256xf32> to vector<16x256xf32>
      %165 = arith.mulf %162, %164 : vector<16x256xf32>
      %166 = arith.truncf %165 : vector<16x256xf32> to vector<16x256xbf16>
      %c0_85 = arith.constant 0 : index
      %c0_86 = arith.constant 0 : index
      %167 = vector.load %arg16[%c0_85, %c0_86] : memref<144x256xbf16, #tpu.memory_space<vmem>>, vector<16x256xbf16>
      tpu.vector_store %arg16[%c0_85, %c0_86], %166 {strides = array<i32>} : memref<144x256xbf16, #tpu.memory_space<vmem>>, vector<16x256xbf16>,
      %c16_i32_87 = arith.constant 16 : i32
      %168 = tpu.dynamic_rotate %155 by %c16_i32_87 dim 1 : vector<16x256xf32>, i32 -> vector<16x256xf32>
      %169 = vector.extract_strided_slice %3 {offsets = [1, 0], sizes = [1, 256], strides = [1, 1]} : vector<9x256xf32> to vector<1x256xf32>
      %170 = vector.broadcast %169 : vector<1x256xf32> to vector<16x256xf32>
      %171 = arith.mulf %168, %170 : vector<16x256xf32>
      %172 = arith.truncf %171 : vector<16x256xf32> to vector<16x256xbf16>
      %c16_88 = arith.constant 16 : index
      %c0_89 = arith.constant 0 : index
      %173 = vector.load %arg16[%c16_88, %c0_89] : memref<144x256xbf16, #tpu.memory_space<vmem>>, vector<16x256xbf16>
      tpu.vector_store %arg16[%c16_88, %c0_89], %172 {strides = array<i32>} : memref<144x256xbf16, #tpu.memory_space<vmem>>, vector<16x256xbf16>,
      %c15_i32_90 = arith.constant 15 : i32
      %174 = tpu.dynamic_rotate %155 by %c15_i32_90 dim 1 : vector<16x256xf32>, i32 -> vector<16x256xf32>
      %175 = vector.extract_strided_slice %3 {offsets = [2, 0], sizes = [1, 256], strides = [1, 1]} : vector<9x256xf32> to vector<1x256xf32>
      %176 = vector.broadcast %175 : vector<1x256xf32> to vector<16x256xf32>
      %177 = arith.mulf %174, %176 : vector<16x256xf32>
      %178 = arith.truncf %177 : vector<16x256xf32> to vector<16x256xbf16>
      %c32_91 = arith.constant 32 : index
      %c0_92 = arith.constant 0 : index
      %179 = vector.load %arg16[%c32_91, %c0_92] : memref<144x256xbf16, #tpu.memory_space<vmem>>, vector<16x256xbf16>
      tpu.vector_store %arg16[%c32_91, %c0_92], %178 {strides = array<i32>} : memref<144x256xbf16, #tpu.memory_space<vmem>>, vector<16x256xbf16>,
      %c1_i32_93 = arith.constant 1 : i32
      %180 = tpu.dynamic_rotate %155 by %c1_i32_93 dim 1 : vector<16x256xf32>, i32 -> vector<16x256xf32>
      %181 = vector.extract_strided_slice %3 {offsets = [3, 0], sizes = [1, 256], strides = [1, 1]} : vector<9x256xf32> to vector<1x256xf32>
      %182 = vector.broadcast %181 : vector<1x256xf32> to vector<16x256xf32>
      %183 = arith.mulf %180, %182 : vector<16x256xf32>
      %184 = arith.truncf %183 : vector<16x256xf32> to vector<16x256xbf16>
      %c48_94 = arith.constant 48 : index
      %c0_95 = arith.constant 0 : index
      %185 = vector.load %arg16[%c48_94, %c0_95] : memref<144x256xbf16, #tpu.memory_space<vmem>>, vector<16x256xbf16>
      tpu.vector_store %arg16[%c48_94, %c0_95], %184 {strides = array<i32>} : memref<144x256xbf16, #tpu.memory_space<vmem>>, vector<16x256xbf16>,
      %186 = arith.truncf %155 : vector<16x256xf32> to vector<16x256xbf16>
      %c64_96 = arith.constant 64 : index
      %c0_97 = arith.constant 0 : index
      %187 = vector.load %arg16[%c64_96, %c0_97] : memref<144x256xbf16, #tpu.memory_space<vmem>>, vector<16x256xbf16>
      tpu.vector_store %arg16[%c64_96, %c0_97], %186 {strides = array<i32>} : memref<144x256xbf16, #tpu.memory_space<vmem>>, vector<16x256xbf16>,
      %c255_i32_98 = arith.constant 255 : i32
      %188 = tpu.dynamic_rotate %155 by %c255_i32_98 dim 1 : vector<16x256xf32>, i32 -> vector<16x256xf32>
      %189 = vector.extract_strided_slice %3 {offsets = [5, 0], sizes = [1, 256], strides = [1, 1]} : vector<9x256xf32> to vector<1x256xf32>
      %190 = vector.broadcast %189 : vector<1x256xf32> to vector<16x256xf32>
      %191 = arith.mulf %188, %190 : vector<16x256xf32>
      %192 = arith.truncf %191 : vector<16x256xf32> to vector<16x256xbf16>
      %c80_99 = arith.constant 80 : index
      %c0_100 = arith.constant 0 : index
      %193 = vector.load %arg16[%c80_99, %c0_100] : memref<144x256xbf16, #tpu.memory_space<vmem>>, vector<16x256xbf16>
      tpu.vector_store %arg16[%c80_99, %c0_100], %192 {strides = array<i32>} : memref<144x256xbf16, #tpu.memory_space<vmem>>, vector<16x256xbf16>,
      %c241_i32_101 = arith.constant 241 : i32
      %194 = tpu.dynamic_rotate %155 by %c241_i32_101 dim 1 : vector<16x256xf32>, i32 -> vector<16x256xf32>
      %195 = vector.extract_strided_slice %3 {offsets = [6, 0], sizes = [1, 256], strides = [1, 1]} : vector<9x256xf32> to vector<1x256xf32>
      %196 = vector.broadcast %195 : vector<1x256xf32> to vector<16x256xf32>
      %197 = arith.mulf %194, %196 : vector<16x256xf32>
      %198 = arith.truncf %197 : vector<16x256xf32> to vector<16x256xbf16>
      %c96_102 = arith.constant 96 : index
      %c0_103 = arith.constant 0 : index
      %199 = vector.load %arg16[%c96_102, %c0_103] : memref<144x256xbf16, #tpu.memory_space<vmem>>, vector<16x256xbf16>
      tpu.vector_store %arg16[%c96_102, %c0_103], %198 {strides = array<i32>} : memref<144x256xbf16, #tpu.memory_space<vmem>>, vector<16x256xbf16>,
      %c240_i32_104 = arith.constant 240 : i32
      %200 = tpu.dynamic_rotate %155 by %c240_i32_104 dim 1 : vector<16x256xf32>, i32 -> vector<16x256xf32>
      %201 = vector.extract_strided_slice %3 {offsets = [7, 0], sizes = [1, 256], strides = [1, 1]} : vector<9x256xf32> to vector<1x256xf32>
      %202 = vector.broadcast %201 : vector<1x256xf32> to vector<16x256xf32>
      %203 = arith.mulf %200, %202 : vector<16x256xf32>
      %204 = arith.truncf %203 : vector<16x256xf32> to vector<16x256xbf16>
      %c112_105 = arith.constant 112 : index
      %c0_106 = arith.constant 0 : index
      %205 = vector.load %arg16[%c112_105, %c0_106] : memref<144x256xbf16, #tpu.memory_space<vmem>>, vector<16x256xbf16>
      tpu.vector_store %arg16[%c112_105, %c0_106], %204 {strides = array<i32>} : memref<144x256xbf16, #tpu.memory_space<vmem>>, vector<16x256xbf16>,
      %c239_i32_107 = arith.constant 239 : i32
      %206 = tpu.dynamic_rotate %155 by %c239_i32_107 dim 1 : vector<16x256xf32>, i32 -> vector<16x256xf32>
      %207 = vector.extract_strided_slice %3 {offsets = [8, 0], sizes = [1, 256], strides = [1, 1]} : vector<9x256xf32> to vector<1x256xf32>
      %208 = vector.broadcast %207 : vector<1x256xf32> to vector<16x256xf32>
      %209 = arith.mulf %206, %208 : vector<16x256xf32>
      %210 = arith.truncf %209 : vector<16x256xf32> to vector<16x256xbf16>
      %c128_108 = arith.constant 128 : index
      %c0_109 = arith.constant 0 : index
      %211 = vector.load %arg16[%c128_108, %c0_109] : memref<144x256xbf16, #tpu.memory_space<vmem>>, vector<16x256xbf16>
      tpu.vector_store %arg16[%c128_108, %c0_109], %210 {strides = array<i32>} : memref<144x256xbf16, #tpu.memory_space<vmem>>, vector<16x256xbf16>,
      %c0_110 = arith.constant 0 : index
      %c0_111 = arith.constant 0 : index
      %212 = vector.load %arg16[%c0_110, %c0_111] : memref<144x256xbf16, #tpu.memory_space<vmem>>, vector<144x256xbf16>
      %cst_112 = arith.constant dense<0.000000e+00> : vector<16x256xf32>
      %213 = tpu.matmul %160, %212, %cst_112 {dimension_numbers = #tpu.dot_dimension_numbers<[1], [0], [0], [1], [0, 0, 1, 1], [], []>} : vector<16x144xbf16>, vector<144x256xbf16>, vector<16x256xf32> -> vector<16x256xf32>
      %214 = vector.broadcast %161 : vector<16x1xf32> to vector<16x256xf32>
      %215 = arith.addf %213, %214 : vector<16x256xf32>
      %c0_113 = arith.constant 0 : index
      %c0_114 = arith.constant 0 : index
      %c0_115 = arith.constant 0 : index
      %216 = vector.load %arg2[%c0_113, %c0_114, %c0_115] : memref<1x16x256xf32, #tpu.memory_space<vmem>>, vector<1x16x256xf32>
      %217 = vector.shape_cast %216 : vector<1x16x256xf32> to vector<16x256xf32>
      %218 = arith.addf %215, %217 : vector<16x256xf32>
      %c0_116 = arith.constant 0 : index
      %c0_117 = arith.constant 0 : index
      %c0_118 = arith.constant 0 : index
      %219 = vector.load %arg14[%c0_116, %c0_117, %c0_118] : memref<1x16x256xf32, #tpu.memory_space<vmem>>, vector<1x16x256xf32>
      %220 = vector.shape_cast %219 : vector<1x16x256xf32> to vector<16x256xf32>
      %221 = vector.shape_cast %218 : vector<16x256xf32> to vector<1x16x256xf32>
      tpu.vector_store %arg14[%c0_116, %c0_117, %c0_118], %221 {strides = array<i32>} : memref<1x16x256xf32, #tpu.memory_space<vmem>>, vector<1x16x256xf32>,
    } else {
    }
    return
  }
  func.func @transform_0(%arg0: i32, %arg1: i32) -> (i32, i32, i32) {
    %c0_i32 = arith.constant 0 : i32
    %c0_i32_0 = arith.constant 0 : i32
    %c0_i32_1 = arith.constant 0 : i32
    return %arg0, %c0_i32, %c0_i32_0 : i32, i32, i32
  }
  func.func @transform_1(%arg0: i32, %arg1: i32) -> (i32, i32) {
    %c0_i32 = arith.constant 0 : i32
    %c0_i32_0 = arith.constant 0 : i32
    %c0_i32_1 = arith.constant 0 : i32
    return %c0_i32, %c0_i32_0 : i32, i32
  }
  func.func @transform_2(%arg0: i32, %arg1: i32) -> (i32, i32, i32) {
    %c0_i32 = arith.constant 0 : i32
    %c0_i32_0 = arith.constant 0 : i32
    %c0_i32_1 = arith.constant 0 : i32
    return %arg1, %c0_i32, %c0_i32_0 : i32, i32, i32
  }
  func.func @transform_3(%arg0: i32, %arg1: i32) -> (i32, i32, i32) {
    %c0_i32 = arith.constant 0 : i32
    %c0_i32_0 = arith.constant 0 : i32
    %c0_i32_1 = arith.constant 0 : i32
    return %arg1, %c0_i32, %c0_i32_0 : i32, i32, i32
  }
  func.func @transform_4(%arg0: i32, %arg1: i32) -> (i32, i32, i32) {
    %c0_i32 = arith.constant 0 : i32
    %c0_i32_0 = arith.constant 0 : i32
    %c0_i32_1 = arith.constant 0 : i32
    return %arg1, %c0_i32, %c0_i32_0 : i32, i32, i32
  }
  func.func @transform_5(%arg0: i32, %arg1: i32) -> (i32, i32, i32) {
    %c0_i32 = arith.constant 0 : i32
    %c0_i32_0 = arith.constant 0 : i32
    %c0_i32_1 = arith.constant 0 : i32
    return %arg1, %c0_i32, %c0_i32_0 : i32, i32, i32
  }
  func.func @transform_6(%arg0: i32, %arg1: i32) -> (i32, i32, i32) {
    %c0_i32 = arith.constant 0 : i32
    %c0_i32_0 = arith.constant 0 : i32
    %c0_i32_1 = arith.constant 0 : i32
    return %arg1, %c0_i32, %c0_i32_0 : i32, i32, i32
  }
  func.func @transform_7(%arg0: i32, %arg1: i32) -> (i32, i32, i32) {
    %c0_i32 = arith.constant 0 : i32
    %c0_i32_0 = arith.constant 0 : i32
    %c0_i32_1 = arith.constant 0 : i32
    return %arg1, %c0_i32, %c0_i32_0 : i32, i32, i32
  }
  func.func @transform_8(%arg0: i32, %arg1: i32) -> (i32, i32, i32) {
    %c0_i32 = arith.constant 0 : i32
    %c0_i32_0 = arith.constant 0 : i32
    %c0_i32_1 = arith.constant 0 : i32
    return %arg1, %c0_i32, %c0_i32_0 : i32, i32, i32
  }
  func.func @transform_9(%arg0: i32, %arg1: i32) -> (i32, i32, i32) {
    %c0_i32 = arith.constant 0 : i32
    %c0_i32_0 = arith.constant 0 : i32
    %c0_i32_1 = arith.constant 0 : i32
    return %arg1, %c0_i32, %c0_i32_0 : i32, i32, i32
  }
  func.func @transform_10(%arg0: i32, %arg1: i32) -> (i32, i32) {
    %c0_i32 = arith.constant 0 : i32
    %c0_i32_0 = arith.constant 0 : i32
    %c0_i32_1 = arith.constant 0 : i32
    return %c0_i32, %c0_i32_0 : i32, i32
  }
  func.func @transform_11(%arg0: i32, %arg1: i32) -> (i32, i32) {
    %c0_i32 = arith.constant 0 : i32
    %c0_i32_0 = arith.constant 0 : i32
    %c0_i32_1 = arith.constant 0 : i32
    return %c0_i32, %c0_i32_0 : i32, i32
  }
  func.func @transform_12(%arg0: i32, %arg1: i32) -> (i32, i32, i32) {
    %c0_i32 = arith.constant 0 : i32
    %c0_i32_0 = arith.constant 0 : i32
    %c0_i32_1 = arith.constant 0 : i32
    return %arg0, %c0_i32, %c0_i32_0 : i32, i32, i32
  }
}

</mosaic_0001>

<llo_original>
// kernel: tpu_custom_call.1
$region0: #{tpu_custom_call.1}
  #allocation0 [shape = 'u32[]', space=smem, size = 0x4, offset = 0x4, fixed_abs, tag = 'smem constant byte address 0x4 - core index']
  #allocation1 [shape = 'u32[144,128]{1,0:T(1,128)}', space=vmem, size = 0x12000, scoped, tag = 'internal scratch']
  #allocation2 [shape = 'f32[16,256]{1,0:T(8,128)}', space=vmem, size = 0x4000, scoped, tag = 'scratch operand']
  #allocation3 [shape = 'bf16[144,256]{1,0:T(16,128)(2,1)}', space=vmem, size = 0x12000, scoped, tag = 'scratch operand']
  %s0 = inlined_call_operand.vmem [shape: f32[2,16,256], index: 0, kind: input, shape index: {}]
  %s1 = inlined_call_operand.vmem [shape: f32[9,256], index: 1, kind: input, shape index: {}]
  %s2 = inlined_call_operand.vmem [shape: bf16[2,16,144], index: 2, kind: input, shape index: {}]
  %s3 = inlined_call_operand.vmem [shape: f32[2,16,1], index: 3, kind: input, shape index: {}]
  %s4 = inlined_call_operand.vmem [shape: bf16[2,16,144], index: 4, kind: input, shape index: {}]
  %s5 = inlined_call_operand.vmem [shape: f32[2,16,1], index: 5, kind: input, shape index: {}]
  %s6 = inlined_call_operand.hbm [shape: bf16[2,4,16], index: 6, kind: input, shape index: {}]
  %s7 = inlined_call_operand.vmem [shape: f32[2,4,1], index: 7, kind: input, shape index: {}]
  %s8 = inlined_call_operand.vmem [shape: bf16[2,16,4], index: 8, kind: input, shape index: {}]
  %s9 = inlined_call_operand.vmem [shape: f32[2,16,1], index: 9, kind: input, shape index: {}]
  %s10 = inlined_call_operand.vmem [shape: bf16[16,144], index: 10, kind: input, shape index: {}]
  %s11 = inlined_call_operand.vmem [shape: f32[16,1], index: 11, kind: input, shape index: {}]
  %s12 = inlined_call_operand.hbm [shape: f32[2,16,256], index: 12, kind: output, shape index: {}]
  %s13 = sld [smem:[#allocation0]]
  $region93: #{tpu_custom_call.1} parent=0
    _
  %s15 = ssub.s32 1, %s13
  %s16 = scalar_select 0, %s15, %s13
  $region1: #{tpu_custom_call.1} parent=0
    #allocation4 [shape = 'u8[2048]{0}', space=vmem, size = 0x800, scoped, tag = 'input window, operand 6']
    #allocation5 [shape = 's32[2]{0}', space=sflag, size = 0x8, scoped, tag = 'scoped memory for tpu_custom_call.1']
    #allocation6 [shape = 's32[2]{0}', space=sflag, size = 0x8, scoped, tag = 'scoped memory for tpu_custom_call.1']
    #allocation7 [shape = 'u8[32768]{0}', space=vmem, size = 0x8000, scoped, tag = 'output window, operand 0']
    %17 = vsyncpa [#allocation5], 0
    %s18 = scalar_lea.sflag [#allocation5], 1
    %19 = vsyncpa %s18, 0
    %20 = vsyncpa [#allocation6], 0
    %s21 = scalar_lea.sflag [#allocation6], 1
    %22 = vsyncpa %s21, 0
    loop: start=0, step=1, limit=6
    $region2: #{tpu_custom_call.1} parent=1 // loop_pre_header
      _
    $region3: #{tpu_custom_call.1} parent=1 // loop_header
      %s24 = sphi 0, %s28
      %p25 = scmp.ge.s32.totalorder %s24, 6
      %s31 = sphi 0, %s43
      %s32 = sphi 0, %s39
      %s33 = sphi 0, %s31
      %s34 = sphi 0, %s32
      %s35 = sphi 0, %s33
      %s36 = sphi 0, %s34
      %s46 = sphi 0, %s48
      %s49 = sphi 0, %s46
      %s50 = sphi 0, %s49
      %s66 = sphi 0, %s50
      %s70 = sphi 0, %s70
      %s72 = sphi 0, %s70
      %s73 = sphi 0, %s72
      %s87 = sphi 0, %s73
      %s93 = sphi 0, %s95
      %s96 = sphi 0, %s93
      %s97 = sphi 0, %s96
      %s113 = sphi 0, %s97
      %s119 = sphi 0, %s121
      %s122 = sphi 0, %s119
      %s123 = sphi 0, %s122
      %s139 = sphi 0, %s123
      %s145 = sphi 0, %s147
      %s148 = sphi 0, %s145
      %s149 = sphi 0, %s148
      %s165 = sphi 0, %s149
      %s171 = sphi 0, %s173
      %s174 = sphi 0, %s171
      %s175 = sphi 0, %s174
      %s191 = sphi 0, %s175
      %s197 = sphi 0, %s199
      %s200 = sphi 0, %s197
      %s201 = sphi 0, %s200
      %s217 = sphi 0, %s201
      %s223 = sphi 0, %s225
      %s226 = sphi 0, %s223
      %s227 = sphi 0, %s226
      %s243 = sphi 0, %s227
      %s249 = sphi 0, %s251
      %s252 = sphi 0, %s249
      %s253 = sphi 0, %s252
      %s269 = sphi 0, %s253
      %s275 = sphi 0, %s277
      %s278 = sphi 0, %s275
      %s279 = sphi 0, %s278
      %s295 = sphi 0, %s279
      %s299 = sphi 0, %s299
      %s301 = sphi 0, %s299
      %s302 = sphi 0, %s301
      %s316 = sphi 0, %s302
      %s320 = sphi 0, %s320
      %s322 = sphi 0, %s320
      %s323 = sphi 0, %s322
      %s337 = sphi 0, %s323
      %s343 = sphi 0, %s345
      %s346 = sphi 0, %s343
      %s347 = sphi 0, %s346
      %s363 = sphi 0, %s347
    $region4: #{tpu_custom_call.1} parent=1 // loop_header_branch
      %27 = sbr.rel (%p25) target = $region8
    $region5: #{tpu_custom_call.1} parent=1 // loop_body
      %s29 = ssub.s32 %s24, 1
      %s30 = ssub.s32 %s24, 2
      %s37 = sadd.s32 1, %s32
      %p38 = scmp.ge.s32.totalorder %s37, 2
      %s39 = scalar_select %p38, 0, %s37
      %s40 = sadd.s32 1, %s31
      %s41 = scalar_select %p38, %s40, %s31
      %p42 = scmp.ge.s32.totalorder %s41, 2
      %s43 = scalar_select %p42, 0, %s41
      %s44 = ssub.s32 %s31, %s43
      %p45 = scmp.eq.s32.totalorder %s44, 0
      %s47 = sadd.s32 %s46, 1
      %s48 = scalar_select %p45, %s46, %s47
      %p51 = pneg %p45
      %p52 = scmp.eq.s32.totalorder %s24, 3
      %p53 = por %p51, %p52
      %p54 = scmp.ne.s32.totalorder %s46, %s49
      %p55 = scmp.eq.s32.totalorder %s24, 0
      %p56 = por %p54, %p55
      %p57 = scmp.ne.s32.totalorder %s46, %s49
      %p58 = scmp.eq.s32.totalorder %s29, 3
      %p59 = por %p57, %p58
      %p60 = scmp.ne.s32.totalorder %s49, %s50
      %p61 = scmp.eq.s32.totalorder %s29, 0
      %p62 = por %p60, %p61
      %p63 = scmp.ne.s32.totalorder %s49, %s50
      %p64 = scmp.eq.s32.totalorder %s30, 3
      %p65 = por %p63, %p64
      %p67 = scmp.ne.s32.totalorder %s50, %s66
      %p68 = scmp.eq.s32.totalorder %s30, 0
      %p69 = por %p67, %p68
      %s71 = sadd.s32 %s70, 1
      %p74 = scmp.eq.s32.totalorder %s24, 3
      %p75 = scmp.ne.s32.totalorder %s70, %s72
      %p76 = scmp.eq.s32.totalorder %s24, 0
      %p77 = por %p75, %p76
      %p78 = scmp.ne.s32.totalorder %s70, %s72
      %p79 = scmp.eq.s32.totalorder %s29, 3
      %p80 = por %p78, %p79
      %p81 = scmp.ne.s32.totalorder %s72, %s73
      %p82 = scmp.eq.s32.totalorder %s29, 0
      %p83 = por %p81, %p82
      %p84 = scmp.ne.s32.totalorder %s72, %s73
      %p85 = scmp.eq.s32.totalorder %s30, 3
      %p86 = por %p84, %p85
      %p88 = scmp.ne.s32.totalorder %s73, %s87
      %p89 = scmp.eq.s32.totalorder %s30, 0
      %p90 = por %p88, %p89
      %s91 = ssub.s32 %s32, %s39
      %p92 = scmp.eq.s32.totalorder %s91, 0
      %s94 = sadd.s32 %s93, 1
      %s95 = scalar_select %p92, %s93, %s94
      %p98 = pneg %p92
      %p99 = scmp.eq.s32.totalorder %s24, 3
      %p100 = por %p98, %p99
      %p101 = scmp.ne.s32.totalorder %s93, %s96
      %p102 = scmp.eq.s32.totalorder %s24, 0
      %p103 = por %p101, %p102
      %p104 = scmp.ne.s32.totalorder %s93, %s96
      %p105 = scmp.eq.s32.totalorder %s29, 3
      %p106 = por %p104, %p105
      %p107 = scmp.ne.s32.totalorder %s96, %s97
      %p108 = scmp.eq.s32.totalorder %s29, 0
      %p109 = por %p107, %p108
      %p110 = scmp.ne.s32.totalorder %s96, %s97
      %p111 = scmp.eq.s32.totalorder %s30, 3
      %p112 = por %p110, %p111
      %p114 = scmp.ne.s32.totalorder %s97, %s113
      %p115 = scmp.eq.s32.totalorder %s30, 0
      %p116 = por %p114, %p115
      %s117 = ssub.s32 %s32, %s39
      %p118 = scmp.eq.s32.totalorder %s117, 0
      %s120 = sadd.s32 %s119, 1
      %s121 = scalar_select %p118, %s119, %s120
      %p124 = pneg %p118
      %p125 = scmp.eq.s32.totalorder %s24, 3
      %p126 = por %p124, %p125
      %p127 = scmp.ne.s32.totalorder %s119, %s122
      %p128 = scmp.eq.s32.totalorder %s24, 0
      %p129 = por %p127, %p128
      %p130 = scmp.ne.s32.totalorder %s119, %s122
      %p131 = scmp.eq.s32.totalorder %s29, 3
      %p132 = por %p130, %p131
      %p133 = scmp.ne.s32.totalorder %s122, %s123
      %p134 = scmp.eq.s32.totalorder %s29, 0
      %p135 = por %p133, %p134
      %p136 = scmp.ne.s32.totalorder %s122, %s123
      %p137 = scmp.eq.s32.totalorder %s30, 3
      %p138 = por %p136, %p137
      %p140 = scmp.ne.s32.totalorder %s123, %s139
      %p141 = scmp.eq.s32.totalorder %s30, 0
      %p142 = por %p140, %p141
      %s143 = ssub.s32 %s32, %s39
      %p144 = scmp.eq.s32.totalorder %s143, 0
      %s146 = sadd.s32 %s145, 1
      %s147 = scalar_select %p144, %s145, %s146
      %p150 = pneg %p144
      %p151 = scmp.eq.s32.totalorder %s24, 3
      %p152 = por %p150, %p151
      %p153 = scmp.ne.s32.totalorder %s145, %s148
      %p154 = scmp.eq.s32.totalorder %s24, 0
      %p155 = por %p153, %p154
      %p156 = scmp.ne.s32.totalorder %s145, %s148
      %p157 = scmp.eq.s32.totalorder %s29, 3
      %p158 = por %p156, %p157
      %p159 = scmp.ne.s32.totalorder %s148, %s149
      %p160 = scmp.eq.s32.totalorder %s29, 0
      %p161 = por %p159, %p160
      %p162 = scmp.ne.s32.totalorder %s148, %s149
      %p163 = scmp.eq.s32.totalorder %s30, 3
      %p164 = por %p162, %p163
      %p166 = scmp.ne.s32.totalorder %s149, %s165
      %p167 = scmp.eq.s32.totalorder %s30, 0
      %p168 = por %p166, %p167
      %s169 = ssub.s32 %s32, %s39
      %p170 = scmp.eq.s32.totalorder %s169, 0
      %s172 = sadd.s32 %s171, 1
      %s173 = scalar_select %p170, %s171, %s172
      %p176 = pneg %p170
      %p177 = scmp.eq.s32.totalorder %s24, 3
      %p178 = por %p176, %p177
      %p179 = scmp.ne.s32.totalorder %s171, %s174
      %p180 = scmp.eq.s32.totalorder %s24, 0
      %p181 = por %p179, %p180
      %p182 = scmp.ne.s32.totalorder %s171, %s174
      %p183 = scmp.eq.s32.totalorder %s29, 3
      %p184 = por %p182, %p183
      %p185 = scmp.ne.s32.totalorder %s174, %s175
      %p186 = scmp.eq.s32.totalorder %s29, 0
      %p187 = por %p185, %p186
      %p188 = scmp.ne.s32.totalorder %s174, %s175
      %p189 = scmp.eq.s32.totalorder %s30, 3
      %p190 = por %p188, %p189
      %p192 = scmp.ne.s32.totalorder %s175, %s191
      %p193 = scmp.eq.s32.totalorder %s30, 0
      %p194 = por %p192, %p193
      %s195 = ssub.s32 %s32, %s39
      %p196 = scmp.eq.s32.totalorder %s195, 0
      %s198 = sadd.s32 %s197, 1
      %s199 = scalar_select %p196, %s197, %s198
      %p202 = pneg %p196
      %p203 = scmp.eq.s32.totalorder %s24, 3
      %p204 = por %p202, %p203
      %p205 = scmp.ne.s32.totalorder %s197, %s200
      %p206 = scmp.eq.s32.totalorder %s24, 0
      %p207 = por %p205, %p206
      %p208 = scmp.ne.s32.totalorder %s197, %s200
      %p209 = scmp.eq.s32.totalorder %s29, 3
      %p210 = por %p208, %p209
      %p211 = scmp.ne.s32.totalorder %s200, %s201
      %p212 = scmp.eq.s32.totalorder %s29, 0
      %p213 = por %p211, %p212
      %p214 = scmp.ne.s32.totalorder %s200, %s201
      %p215 = scmp.eq.s32.totalorder %s30, 3
      %p216 = por %p214, %p215
      %p218 = scmp.ne.s32.totalorder %s201, %s217
      %p219 = scmp.eq.s32.totalorder %s30, 0
      %p220 = por %p218, %p219
      %s221 = ssub.s32 %s32, %s39
      %p222 = scmp.eq.s32.totalorder %s221, 0
      %s224 = sadd.s32 %s223, 1
      %s225 = scalar_select %p222, %s223, %s224
      %p228 = pneg %p222
      %p229 = scmp.eq.s32.totalorder %s24, 3
      %p230 = por %p228, %p229
      %p231 = scmp.ne.s32.totalorder %s223, %s226
      %p232 = scmp.eq.s32.totalorder %s24, 0
      %p233 = por %p231, %p232
      %p234 = scmp.ne.s32.totalorder %s223, %s226
      %p235 = scmp.eq.s32.totalorder %s29, 3
      %p236 = por %p234, %p235
      %p237 = scmp.ne.s32.totalorder %s226, %s227
      %p238 = scmp.eq.s32.totalorder %s29, 0
      %p239 = por %p237, %p238
      %p240 = scmp.ne.s32.totalorder %s226, %s227
      %p241 = scmp.eq.s32.totalorder %s30, 3
      %p242 = por %p240, %p241
      %p244 = scmp.ne.s32.totalorder %s227, %s243
      %p245 = scmp.eq.s32.totalorder %s30, 0
      %p246 = por %p244, %p245
      %s247 = ssub.s32 %s32, %s39
      %p248 = scmp.eq.s32.totalorder %s247, 0
      %s250 = sadd.s32 %s249, 1
      %s251 = scalar_select %p248, %s249, %s250
      %p254 = pneg %p248
      %p255 = scmp.eq.s32.totalorder %s24, 3
      %p256 = por %p254, %p255
      %p257 = scmp.ne.s32.totalorder %s249, %s252
      %p258 = scmp.eq.s32.totalorder %s24, 0
      %p259 = por %p257, %p258
      %p260 = scmp.ne.s32.totalorder %s249, %s252
      %p261 = scmp.eq.s32.totalorder %s29, 3
      %p262 = por %p260, %p261
      %p263 = scmp.ne.s32.totalorder %s252, %s253
      %p264 = scmp.eq.s32.totalorder %s29, 0
      %p265 = por %p263, %p264
      %p266 = scmp.ne.s32.totalorder %s252, %s253
      %p267 = scmp.eq.s32.totalorder %s30, 3
      %p268 = por %p266, %p267
      %p270 = scmp.ne.s32.totalorder %s253, %s269
      %p271 = scmp.eq.s32.totalorder %s30, 0
      %p272 = por %p270, %p271
      %s273 = ssub.s32 %s32, %s39
      %p274 = scmp.eq.s32.totalorder %s273, 0
      %s276 = sadd.s32 %s275, 1
      %s277 = scalar_select %p274, %s275, %s276
      %p280 = pneg %p274
      %p281 = scmp.eq.s32.totalorder %s24, 3
      %p282 = por %p280, %p281
      %p283 = scmp.ne.s32.totalorder %s275, %s278
      %p284 = scmp.eq.s32.totalorder %s24, 0
      %p285 = por %p283, %p284
      %p286 = scmp.ne.s32.totalorder %s275, %s278
      %p287 = scmp.eq.s32.totalorder %s29, 3
      %p288 = por %p286, %p287
      %p289 = scmp.ne.s32.totalorder %s278, %s279
      %p290 = scmp.eq.s32.totalorder %s29, 0
      %p291 = por %p289, %p290
      %p292 = scmp.ne.s32.totalorder %s278, %s279
      %p293 = scmp.eq.s32.totalorder %s30, 3
      %p294 = por %p292, %p293
      %p296 = scmp.ne.s32.totalorder %s279, %s295
      %p297 = scmp.eq.s32.totalorder %s30, 0
      %p298 = por %p296, %p297
      %s300 = sadd.s32 %s299, 1
      %p303 = scmp.eq.s32.totalorder %s24, 3
      %p304 = scmp.ne.s32.totalorder %s299, %s301
      %p305 = scmp.eq.s32.totalorder %s24, 0
      %p306 = por %p304, %p305
      %p307 = scmp.ne.s32.totalorder %s299, %s301
      %p308 = scmp.eq.s32.totalorder %s29, 3
      %p309 = por %p307, %p308
      %p310 = scmp.ne.s32.totalorder %s301, %s302
      %p311 = scmp.eq.s32.totalorder %s29, 0
      %p312 = por %p310, %p311
      %p313 = scmp.ne.s32.totalorder %s301, %s302
      %p314 = scmp.eq.s32.totalorder %s30, 3
      %p315 = por %p313, %p314
      %p317 = scmp.ne.s32.totalorder %s302, %s316
      %p318 = scmp.eq.s32.totalorder %s30, 0
      %p319 = por %p317, %p318
      %s321 = sadd.s32 %s320, 1
      %p324 = scmp.eq.s32.totalorder %s24, 3
      %p325 = scmp.ne.s32.totalorder %s320, %s322
      %p326 = scmp.eq.s32.totalorder %s24, 0
      %p327 = por %p325, %p326
      %p328 = scmp.ne.s32.totalorder %s320, %s322
      %p329 = scmp.eq.s32.totalorder %s29, 3
      %p330 = por %p328, %p329
      %p331 = scmp.ne.s32.totalorder %s322, %s323
      %p332 = scmp.eq.s32.totalorder %s29, 0
      %p333 = por %p331, %p332
      %p334 = scmp.ne.s32.totalorder %s322, %s323
      %p335 = scmp.eq.s32.totalorder %s30, 3
      %p336 = por %p334, %p335
      %p338 = scmp.ne.s32.totalorder %s323, %s337
      %p339 = scmp.eq.s32.totalorder %s30, 0
      %p340 = por %p338, %p339
      %s341 = ssub.s32 %s31, %s43
      %p342 = scmp.eq.s32.totalorder %s341, 0
      %s344 = sadd.s32 %s343, 1
      %s345 = scalar_select %p342, %s343, %s344
      %p348 = pneg %p342
      %p349 = scmp.eq.s32.totalorder %s24, 3
      %p350 = por %p348, %p349
      %p351 = scmp.ne.s32.totalorder %s343, %s346
      %p352 = scmp.eq.s32.totalorder %s24, 0
      %p353 = por %p351, %p352
      %p354 = scmp.ne.s32.totalorder %s343, %s346
      %p355 = scmp.eq.s32.totalorder %s29, 3
      %p356 = por %p354, %p355
      %p357 = scmp.ne.s32.totalorder %s346, %s347
      %p358 = scmp.eq.s32.totalorder %s29, 0
      %p359 = por %p357, %p358
      %p360 = scmp.ne.s32.totalorder %s346, %s347
      %p361 = scmp.eq.s32.totalorder %s30, 3
      %p362 = por %p360, %p361
      %p364 = scmp.ne.s32.totalorder %s347, %s363
      %p365 = scmp.eq.s32.totalorder %s30, 0
      %p366 = por %p364, %p365
      %p367 = scmp.le.s32.totalorder 1, %s24
      %p368 = scmp.lt.s32.totalorder %s24, 5
      %p369 = pnand %p367, %p368
      %p370 = pneg %p369
      // Predicated region
      $region9: #{tpu_custom_call.1} parent=5 // pred_check
        _
      $region10: #{tpu_custom_call.1} parent=5 // pred_check_branch
        %372 = sbr.rel (%p369) target = $region12
      $region11: #{tpu_custom_call.1} parent=5 // pred_region
        %s373 = ssub.s32 %s24, 1
        // Predicated region
        $region13: #{tpu_custom_call.1} parent=11 // pred_check
          %p374 = pneg %p83
        $region14: #{tpu_custom_call.1} parent=11 // pred_check_branch
          %376 = sbr.rel (%p374) target = $region16
        $region15: #{tpu_custom_call.1} parent=11 // pred_region
          _
        $region16: #{tpu_custom_call.1} parent=11 // pred_fallthru
          _
        // Predicated region
        $region17: #{tpu_custom_call.1} parent=11 // pred_check
          %p377 = pneg %p312
        $region18: #{tpu_custom_call.1} parent=11 // pred_check_branch
          %379 = sbr.rel (%p377) target = $region20
        $region19: #{tpu_custom_call.1} parent=11 // pred_region
          _
        $region20: #{tpu_custom_call.1} parent=11 // pred_fallthru
          _
        // Predicated region
        $region21: #{tpu_custom_call.1} parent=11 // pred_check
          %p380 = pneg %p333
        $region22: #{tpu_custom_call.1} parent=11 // pred_check_branch
          %382 = sbr.rel (%p380) target = $region24
        $region23: #{tpu_custom_call.1} parent=11 // pred_region
          _
        $region24: #{tpu_custom_call.1} parent=11 // pred_fallthru
          _
      $region12: #{tpu_custom_call.1} parent=5 // pred_fallthru
        _
      %p383 = scmp.lt.s32.totalorder %s24, 4
      // Predicated region
      $region25: #{tpu_custom_call.1} parent=5 // pred_check
        %p384 = pneg %p383
      $region26: #{tpu_custom_call.1} parent=5 // pred_check_branch
        %386 = sbr.rel (%p384) target = $region28
      $region27: #{tpu_custom_call.1} parent=5 // pred_region
        // Predicated region
        $region29: #{tpu_custom_call.1} parent=27 // pred_check
          %p387 = pneg %p56
        $region30: #{tpu_custom_call.1} parent=27 // pred_check_branch
          %389 = sbr.rel (%p387) target = $region32
        $region31: #{tpu_custom_call.1} parent=27 // pred_region
          %p390 = scmp.lt.s32.totalorder %s31, 1
          %s391 = scalar_select %p390, %s31, 1
          %s392 = smul.addr %s391, 4
          %s393 = smul.addr %s392, 8
          %s394 = scalar_lea.vmem %s0, %s393
        $region32: #{tpu_custom_call.1} parent=27 // pred_fallthru
          _
        // Predicated region
        $region33: #{tpu_custom_call.1} parent=27 // pred_check
          %p395 = pneg %p103
        $region34: #{tpu_custom_call.1} parent=27 // pred_check_branch
          %397 = sbr.rel (%p395) target = $region36
        $region35: #{tpu_custom_call.1} parent=27 // pred_region
          %p398 = scmp.lt.s32.totalorder %s32, 1
          %s399 = scalar_select %p398, %s32, 1
          %s400 = smul.addr %s399, 4
          %s401 = smul.addr %s400, 4
          %s402 = scalar_lea.vmem %s2, %s401
        $region36: #{tpu_custom_call.1} parent=27 // pred_fallthru
          _
        // Predicated region
        $region37: #{tpu_custom_call.1} parent=27 // pred_check
          %p403 = pneg %p129
        $region38: #{tpu_custom_call.1} parent=27 // pred_check_branch
          %405 = sbr.rel (%p403) target = $region40
        $region39: #{tpu_custom_call.1} parent=27 // pred_region
          %p406 = scmp.lt.s32.totalorder %s32, 1
          %s407 = scalar_select %p406, %s32, 1
          %s408 = smul.addr %s407, 2
          %s409 = smul.addr %s408, 8
          %s410 = scalar_lea.vmem %s3, %s409
        $region40: #{tpu_custom_call.1} parent=27 // pred_fallthru
          _
        // Predicated region
        $region41: #{tpu_custom_call.1} parent=27 // pred_check
          %p411 = pneg %p155
        $region42: #{tpu_custom_call.1} parent=27 // pred_check_branch
          %413 = sbr.rel (%p411) target = $region44
        $region43: #{tpu_custom_call.1} parent=27 // pred_region
          %p414 = scmp.lt.s32.totalorder %s32, 1
          %s415 = scalar_select %p414, %s32, 1
          %s416 = smul.addr %s415, 4
          %s417 = smul.addr %s416, 4
          %s418 = scalar_lea.vmem %s4, %s417
        $region44: #{tpu_custom_call.1} parent=27 // pred_fallthru
          _
        // Predicated region
        $region45: #{tpu_custom_call.1} parent=27 // pred_check
          %p419 = pneg %p181
        $region46: #{tpu_custom_call.1} parent=27 // pred_check_branch
          %421 = sbr.rel (%p419) target = $region48
        $region47: #{tpu_custom_call.1} parent=27 // pred_region
          %p422 = scmp.lt.s32.totalorder %s32, 1
          %s423 = scalar_select %p422, %s32, 1
          %s424 = smul.addr %s423, 2
          %s425 = smul.addr %s424, 8
          %s426 = scalar_lea.vmem %s5, %s425
        $region48: #{tpu_custom_call.1} parent=27 // pred_fallthru
          _
        // Predicated region
        $region49: #{tpu_custom_call.1} parent=27 // pred_check
          %p427 = pneg %p207
        $region50: #{tpu_custom_call.1} parent=27 // pred_check_branch
          %429 = sbr.rel (%p427) target = $region52
        $region51: #{tpu_custom_call.1} parent=27 // pred_region
          %s430 = sand.u32 %s197, 1
          %s431 = scalar_lea.sflag [#allocation5], %s430
          %s432 = sand.u32 %s197, 1
          %s433 = smul.addr %s432, 2
          %s434 = scalar_lea.vmem [#allocation4], %s433
          %s436 = ssub.s32 32, 32
          %437 = vsyncadd %s431, %s436
          %s438 = smul.addr %s32, 32
          %s439 = scalar_lea.hbm %s6, %s438
          %s441 = sshll.u32 %s434, 4
          %s442 = int_to_ptr.vmem [resolvable:$true] %s441
          %444 = dma.hbm_to_vmem [thread:$0]  %s439, 32, %s442, %s431
        $region52: #{tpu_custom_call.1} parent=27 // pred_fallthru
          _
        // Predicated region
        $region53: #{tpu_custom_call.1} parent=27 // pred_check
          %p445 = pneg %p233
        $region54: #{tpu_custom_call.1} parent=27 // pred_check_branch
          %447 = sbr.rel (%p445) target = $region56
        $region55: #{tpu_custom_call.1} parent=27 // pred_region
          %p448 = scmp.lt.s32.totalorder %s32, 1
          %s449 = scalar_select %p448, %s32, 1
          %s450 = smul.addr %s449, 4
          %s451 = scalar_lea.vmem %s7, %s450
        $region56: #{tpu_custom_call.1} parent=27 // pred_fallthru
          _
        // Predicated region
        $region57: #{tpu_custom_call.1} parent=27 // pred_check
          %p452 = pneg %p259
        $region58: #{tpu_custom_call.1} parent=27 // pred_check_branch
          %454 = sbr.rel (%p452) target = $region60
        $region59: #{tpu_custom_call.1} parent=27 // pred_region
          %p455 = scmp.lt.s32.totalorder %s32, 1
          %s456 = scalar_select %p455, %s32, 1
          %s457 = smul.addr %s456, 2
          %s458 = smul.addr %s457, 4
          %s459 = scalar_lea.vmem %s8, %s458
        $region60: #{tpu_custom_call.1} parent=27 // pred_fallthru
          _
        // Predicated region
        $region61: #{tpu_custom_call.1} parent=27 // pred_check
          %p460 = pneg %p285
        $region62: #{tpu_custom_call.1} parent=27 // pred_check_branch
          %462 = sbr.rel (%p460) target = $region64
        $region63: #{tpu_custom_call.1} parent=27 // pred_region
          %p463 = scmp.lt.s32.totalorder %s32, 1
          %s464 = scalar_select %p463, %s32, 1
          %s465 = smul.addr %s464, 2
          %s466 = smul.addr %s465, 8
          %s467 = scalar_lea.vmem %s9, %s466
        $region64: #{tpu_custom_call.1} parent=27 // pred_fallthru
          _
      $region28: #{tpu_custom_call.1} parent=5 // pred_fallthru
        _
      %p468 = scmp.le.s32.totalorder 1, %s24
      %p469 = scmp.lt.s32.totalorder %s24, 5
      %p470 = pnand %p468, %p469
      %p471 = pneg %p470
      // Predicated region
      $region65: #{tpu_custom_call.1} parent=5 // pred_check
        _
      $region66: #{tpu_custom_call.1} parent=5 // pred_check_branch
        %473 = sbr.rel (%p470) target = $region68
      $region67: #{tpu_custom_call.1} parent=5 // pred_region
        %s474 = ssub.s32 %s24, 1
        %s475 = sand.u32 %s200, 1
        %s476 = scalar_lea.sflag [#allocation5], %s475
        %s477 = sand.u32 %s200, 1
        %s478 = smul.addr %s477, 2
        %s479 = scalar_lea.vmem [#allocation4], %s478
        // Predicated region
        $region69: #{tpu_custom_call.1} parent=67 // pred_check
          %p480 = pneg %p213
        $region70: #{tpu_custom_call.1} parent=67 // pred_check_branch
          %482 = sbr.rel (%p480) target = $region72
        $region71: #{tpu_custom_call.1} parent=67 // pred_region
          %483 = dma.done %s476, 32
        $region72: #{tpu_custom_call.1} parent=67 // pred_fallthru
          _
        %p484 = scmp.lt.s32.totalorder %s33, 1
        %s485 = scalar_select %p484, %s33, 1
        %s486 = smul.addr %s485, 4
        %s487 = smul.addr %s486, 8
        %s488 = scalar_lea.vmem %s0, %s487
        %p489 = pneg %p62
        %p490 = pneg %p59
        %p491 = pneg %p83
        %p492 = pneg %p80
        %p493 = scmp.lt.s32.totalorder %s34, 1
        %s494 = scalar_select %p493, %s34, 1
        %s495 = smul.addr %s494, 4
        %s496 = smul.addr %s495, 4
        %s497 = scalar_lea.vmem %s2, %s496
        %p498 = pneg %p109
        %p499 = pneg %p106
        %p500 = scmp.lt.s32.totalorder %s34, 1
        %s501 = scalar_select %p500, %s34, 1
        %s502 = smul.addr %s501, 2
        %s503 = smul.addr %s502, 8
        %s504 = scalar_lea.vmem %s3, %s503
        %p505 = pneg %p135
        %p506 = pneg %p132
        %p507 = scmp.lt.s32.totalorder %s34, 1
        %s508 = scalar_select %p507, %s34, 1
        %s509 = smul.addr %s508, 4
        %s510 = smul.addr %s509, 4
        %s511 = scalar_lea.vmem %s4, %s510
        %p512 = pneg %p161
        %p513 = pneg %p158
        %p514 = scmp.lt.s32.totalorder %s34, 1
        %s515 = scalar_select %p514, %s34, 1
        %s516 = smul.addr %s515, 2
        %s517 = smul.addr %s516, 8
        %s518 = scalar_lea.vmem %s5, %s517
        %p519 = pneg %p187
        %p520 = pneg %p184
        %s521 = sand.u32 %s200, 1
        %s522 = scalar_lea.sflag [#allocation5], %s521
        %s523 = sand.u32 %s200, 1
        %s524 = smul.addr %s523, 2
        %s525 = scalar_lea.vmem [#allocation4], %s524
        %p526 = pneg %p213
        %p527 = pneg %p210
        %p528 = scmp.lt.s32.totalorder %s34, 1
        %s529 = scalar_select %p528, %s34, 1
        %s530 = smul.addr %s529, 4
        %s531 = scalar_lea.vmem %s7, %s530
        %p532 = pneg %p239
        %p533 = pneg %p236
        %p534 = scmp.lt.s32.totalorder %s34, 1
        %s535 = scalar_select %p534, %s34, 1
        %s536 = smul.addr %s535, 2
        %s537 = smul.addr %s536, 4
        %s538 = scalar_lea.vmem %s8, %s537
        %p539 = pneg %p265
        %p540 = pneg %p262
        %p541 = scmp.lt.s32.totalorder %s34, 1
        %s542 = scalar_select %p541, %s34, 1
        %s543 = smul.addr %s542, 2
        %s544 = smul.addr %s543, 8
        %s545 = scalar_lea.vmem %s9, %s544
        %p546 = pneg %p291
        %p547 = pneg %p288
        %p548 = pneg %p312
        %p549 = pneg %p309
        %p550 = pneg %p333
        %p551 = pneg %p330
        %p552 = pneg %p359
        %p553 = pneg %p356
        %s554 = sand.u32 %s346, 1
        %s555 = scalar_lea.sflag [#allocation6], %s554
        %s556 = sand.u32 %s346, 1
        %s557 = smul.addr %s556, 32
        %s558 = scalar_lea.vmem [#allocation7], %s557
        %p559 = scmp.lt.s32.totalorder %s33, 1
        %s560 = scalar_select %p559, %s33, 1
        %s561 = smul.addr %s560, 4
        %s562 = smul.addr %s561, 8
        %s563 = scalar_lea.vmem %s0, %s562
        %p564 = scmp.lt.s32.totalorder %s34, 1
        %s565 = scalar_select %p564, %s34, 1
        %s566 = smul.addr %s565, 4
        %s567 = smul.addr %s566, 4
        %s568 = scalar_lea.vmem %s2, %s567
        %p569 = scmp.lt.s32.totalorder %s34, 1
        %s570 = scalar_select %p569, %s34, 1
        %s571 = smul.addr %s570, 2
        %s572 = smul.addr %s571, 8
        %s573 = scalar_lea.vmem %s3, %s572
        %p574 = scmp.lt.s32.totalorder %s34, 1
        %s575 = scalar_select %p574, %s34, 1
        %s576 = smul.addr %s575, 4
        %s577 = smul.addr %s576, 4
        %s578 = scalar_lea.vmem %s4, %s577
        %p579 = scmp.lt.s32.totalorder %s34, 1
        %s580 = scalar_select %p579, %s34, 1
        %s581 = smul.addr %s580, 2
        %s582 = smul.addr %s581, 8
        %s583 = scalar_lea.vmem %s5, %s582
        %p584 = scmp.lt.s32.totalorder %s34, 1
        %s585 = scalar_select %p584, %s34, 1
        %s586 = smul.addr %s585, 4
        %s587 = scalar_lea.vmem %s7, %s586
        %p588 = scmp.lt.s32.totalorder %s34, 1
        %s589 = scalar_select %p588, %s34, 1
        %s590 = smul.addr %s589, 2
        %s591 = smul.addr %s590, 4
        %s592 = scalar_lea.vmem %s8, %s591
        %p593 = scmp.lt.s32.totalorder %s34, 1
        %s594 = scalar_select %p593, %s34, 1
        %s595 = smul.addr %s594, 2
        %s596 = smul.addr %s595, 8
        %s597 = scalar_lea.vmem %s9, %s596
        %p599 = scmp.eq.s32.totalorder %s34, 0
        // Predicated region
        $region73: #{tpu_custom_call.1} parent=67 // pred_check
          %p600 = pneg %p599
        $region74: #{tpu_custom_call.1} parent=67 // pred_check_branch
          %602 = sbr.rel (%p600) target = $region76
        $region75: #{tpu_custom_call.1} parent=67 // pred_region
          %v603 = vld [vmem:[%s563] sm:$0xff]
          %v604 = vld [vmem:[%s563 + $0x8] sm:$0xff]
          %v605 = vld [vmem:[%s563 + $0x10] sm:$0xff]
          %v606 = vld [vmem:[%s563 + $0x18] sm:$0xff]
          %607 = vst [vmem:[#allocation2] sm:$0xff] %v603
          %608 = vst [vmem:[#allocation2 + $0x8] sm:$0xff] %v604
          %609 = vst [vmem:[#allocation2 + $0x10] sm:$0xff] %v605
          %610 = vst [vmem:[#allocation2 + $0x18] sm:$0xff] %v606
        $region76: #{tpu_custom_call.1} parent=67 // pred_fallthru
          _
        %v611 = vld [vmem:[%s1] sm:$0xff]
        %v612 = vld [vmem:[%s1 + $0x8] sm:$0xff]
        %v613 = vld [vmem:[%s1 + $0x10] sm:$0x1]
        %v614 = vld [vmem:[%s1 + $0x18] sm:$0x1]
        %v615 = vld [vmem:[#allocation2] sm:$0xff]
        %v616 = vld [vmem:[#allocation2 + $0x8] sm:$0xff]
        %v617 = vld [vmem:[#allocation2 + $0x10] sm:$0xff]
        %v618 = vld [vmem:[#allocation2 + $0x18] sm:$0xff]
        %v619 = vld [vmem:[%s568] sm:$0xff]
        %v620 = vld [vmem:[%s568 + $0x8] sm:$0xff]
        %v621 = vld [vmem:[%s573] sm:$0xff]
        %v622 = vld [vmem:[%s573 + $0x8] sm:$0xff]
        %623 = vrot.lane.b32.xlu0 %v615, 17
        %v624 = vpop.permute.xlu0 %623
        %625 = vrot.lane.b32.xlu0 %v617, 17
        %v626 = vpop.permute.xlu0 %625
        %627 = vrot.lane.b32.xlu0 %v616, 17
        %v628 = vpop.permute.xlu0 %627
        %629 = vrot.lane.b32.xlu0 %v618, 17
        %v630 = vpop.permute.xlu0 %629
        %v631 = vlaneseq
        %v632 = vand.u32 %v631, 127
        %vm633 = vcmp.lt.s32.totalorder %v632, 17
        %v634 = vsel %vm633, %v624, %v628
        %v635 = vsel %vm633, %v626, %v630
        %v636 = vsel %vm633, %v628, %v624
        %v637 = vsel %vm633, %v630, %v626
        %v638 = vlaneseq
        %v639 = vshrl.u32 %v638, 7
        %v640 = vsub.s32 0, %v639
        %v641 = vrot.slane %v611, %v640
        %v642 = vlaneseq
        %v643 = vshrl.u32 %v642, 7
        %v644 = vsub.s32 0, %v643
        %v645 = vrot.slane %v612, %v644
        %v646 = vmul.f32 %v636, %v641
        %v647 = vmul.f32 %v634, %v645
        %v648 = vmul.f32 %v637, %v641
        %v649 = vmul.f32 %v635, %v645
        %v650 = vpack.c.bf16 %v648, %v646
        %v651 = vpack.c.bf16 %v649, %v647
        %652 = vst [vmem:[#allocation3] sm:$0xff] %v650
        %653 = vst [vmem:[#allocation3 + $0x8] sm:$0xff] %v651
        %654 = vrot.lane.b32.xlu0 %v615, 16
        %v655 = vpop.permute.xlu0 %654
        %656 = vrot.lane.b32.xlu0 %v617, 16
        %v657 = vpop.permute.xlu0 %656
        %658 = vrot.lane.b32.xlu0 %v616, 16
        %v659 = vpop.permute.xlu0 %658
        %660 = vrot.lane.b32.xlu0 %v618, 16
        %v661 = vpop.permute.xlu0 %660
        %vm662 = vcmp.lt.s32.totalorder %v632, 16
        %v663 = vsel %vm662, %v655, %v659
        %v664 = vsel %vm662, %v657, %v661
        %v665 = vsel %vm662, %v659, %v655
        %v666 = vsel %vm662, %v661, %v657
        %v667 = vlaneseq
        %v668 = vshrl.u32 %v667, 7
        %v669 = vsub.s32 1, %v668
        %v670 = vrot.slane %v611, %v669
        %v671 = vlaneseq
        %v672 = vshrl.u32 %v671, 7
        %v673 = vsub.s32 1, %v672
        %v674 = vrot.slane %v612, %v673
        %v675 = vmul.f32 %v665, %v670
        %v676 = vmul.f32 %v663, %v674
        %v677 = vmul.f32 %v666, %v670
        %v678 = vmul.f32 %v664, %v674
        %v679 = vpack.c.bf16 %v677, %v675
        %v680 = vpack.c.bf16 %v678, %v676
        %681 = vst [vmem:[#allocation3 + $0x10] sm:$0xff] %v679
        %682 = vst [vmem:[#allocation3 + $0x18] sm:$0xff] %v680
        %683 = vrot.lane.b32.xlu0 %v615, 15
        %v684 = vpop.permute.xlu0 %683
        %685 = vrot.lane.b32.xlu0 %v617, 15
        %v686 = vpop.permute.xlu0 %685
        %687 = vrot.lane.b32.xlu0 %v616, 15
        %v688 = vpop.permute.xlu0 %687
        %689 = vrot.lane.b32.xlu0 %v618, 15
        %v690 = vpop.permute.xlu0 %689
        %vm691 = vcmp.lt.s32.totalorder %v632, 15
        %v692 = vsel %vm691, %v684, %v688
        %v693 = vsel %vm691, %v686, %v690
        %v694 = vsel %vm691, %v688, %v684
        %v695 = vsel %vm691, %v690, %v686
        %v696 = vlaneseq
        %v697 = vshrl.u32 %v696, 7
        %v698 = vsub.s32 2, %v697
        %v699 = vrot.slane %v611, %v698
        %v700 = vlaneseq
        %v701 = vshrl.u32 %v700, 7
        %v702 = vsub.s32 2, %v701
        %v703 = vrot.slane %v612, %v702
        %v704 = vmul.f32 %v694, %v699
        %v705 = vmul.f32 %v692, %v703
        %v706 = vmul.f32 %v695, %v699
        %v707 = vmul.f32 %v693, %v703
        %v708 = vpack.c.bf16 %v706, %v704
        %v709 = vpack.c.bf16 %v707, %v705
        %710 = vst [vmem:[#allocation3 + $0x20] sm:$0xff] %v708
        %711 = vst [vmem:[#allocation3 + $0x28] sm:$0xff] %v709
        %712 = vrot.lane.b32.xlu0 %v615, 1
        %v713 = vpop.permute.xlu0 %712
        %714 = vrot.lane.b32.xlu0 %v617, 1
        %v715 = vpop.permute.xlu0 %714
        %716 = vrot.lane.b32.xlu0 %v616, 1
        %v717 = vpop.permute.xlu0 %716
        %718 = vrot.lane.b32.xlu0 %v618, 1
        %v719 = vpop.permute.xlu0 %718
        %vm720 = vcmp.lt.s32.totalorder %v632, 1
        %v721 = vsel %vm720, %v713, %v717
        %v722 = vsel %vm720, %v715, %v719
        %v723 = vsel %vm720, %v717, %v713
        %v724 = vsel %vm720, %v719, %v715
        %v725 = vlaneseq
        %v726 = vshrl.u32 %v725, 7
        %v727 = vsub.s32 3, %v726
        %v728 = vrot.slane %v611, %v727
        %v729 = vlaneseq
        %v730 = vshrl.u32 %v729, 7
        %v731 = vsub.s32 3, %v730
        %v732 = vrot.slane %v612, %v731
        %v733 = vmul.f32 %v723, %v728
        %v734 = vmul.f32 %v721, %v732
        %v735 = vmul.f32 %v724, %v728
        %v736 = vmul.f32 %v722, %v732
        %v737 = vpack.c.bf16 %v735, %v733
        %v738 = vpack.c.bf16 %v736, %v734
        %739 = vst [vmem:[#allocation3 + $0x30] sm:$0xff] %v737
        %740 = vst [vmem:[#allocation3 + $0x38] sm:$0xff] %v738
        %v741 = vpack.c.bf16 %v617, %v615
        %v742 = vpack.c.bf16 %v618, %v616
        %743 = vst [vmem:[#allocation3 + $0x40] sm:$0xff] %v741
        %744 = vst [vmem:[#allocation3 + $0x48] sm:$0xff] %v742
        %745 = vrot.lane.b32.xlu0 %v615, 127
        %v746 = vpop.permute.xlu0 %745
        %747 = vrot.lane.b32.xlu0 %v617, 127
        %v748 = vpop.permute.xlu0 %747
        %749 = vrot.lane.b32.xlu0 %v616, 127
        %v750 = vpop.permute.xlu0 %749
        %751 = vrot.lane.b32.xlu0 %v618, 127
        %v752 = vpop.permute.xlu0 %751
        %vm753 = vcmp.lt.s32.totalorder %v632, 127
        %v754 = vsel %vm753, %v746, %v750
        %v755 = vsel %vm753, %v748, %v752
        %v756 = vsel %vm753, %v750, %v746
        %v757 = vsel %vm753, %v752, %v748
        %v758 = vlaneseq
        %v759 = vshrl.u32 %v758, 7
        %v760 = vsub.s32 5, %v759
        %v761 = vrot.slane %v611, %v760
        %v762 = vlaneseq
        %v763 = vshrl.u32 %v762, 7
        %v764 = vsub.s32 5, %v763
        %v765 = vrot.slane %v612, %v764
        %v766 = vmul.f32 %v754, %v761
        %v767 = vmul.f32 %v756, %v765
        %v768 = vmul.f32 %v755, %v761
        %v769 = vmul.f32 %v757, %v765
        %v770 = vpack.c.bf16 %v768, %v766
        %v771 = vpack.c.bf16 %v769, %v767
        %772 = vst [vmem:[#allocation3 + $0x50] sm:$0xff] %v770
        %773 = vst [vmem:[#allocation3 + $0x58] sm:$0xff] %v771
        %774 = vrot.lane.b32.xlu0 %v615, 113
        %v775 = vpop.permute.xlu0 %774
        %776 = vrot.lane.b32.xlu0 %v617, 113
        %v777 = vpop.permute.xlu0 %776
        %778 = vrot.lane.b32.xlu0 %v616, 113
        %v779 = vpop.permute.xlu0 %778
        %780 = vrot.lane.b32.xlu0 %v618, 113
        %v781 = vpop.permute.xlu0 %780
        %vm782 = vcmp.lt.s32.totalorder %v632, 113
        %v783 = vsel %vm782, %v775, %v779
        %v784 = vsel %vm782, %v777, %v781
        %v785 = vsel %vm782, %v779, %v775
        %v786 = vsel %vm782, %v781, %v777
        %v787 = vlaneseq
        %v788 = vshrl.u32 %v787, 7
        %v789 = vsub.s32 6, %v788
        %v790 = vrot.slane %v611, %v789
        %v791 = vlaneseq
        %v792 = vshrl.u32 %v791, 7
        %v793 = vsub.s32 6, %v792
        %v794 = vrot.slane %v612, %v793
        %v795 = vmul.f32 %v783, %v790
        %v796 = vmul.f32 %v785, %v794
        %v797 = vmul.f32 %v784, %v790
        %v798 = vmul.f32 %v786, %v794
        %v799 = vpack.c.bf16 %v797, %v795
        %v800 = vpack.c.bf16 %v798, %v796
        %801 = vst [vmem:[#allocation3 + $0x60] sm:$0xff] %v799
        %802 = vst [vmem:[#allocation3 + $0x68] sm:$0xff] %v800
        %803 = vrot.lane.b32.xlu0 %v615, 112
        %v804 = vpop.permute.xlu0 %803
        %805 = vrot.lane.b32.xlu0 %v617, 112
        %v806 = vpop.permute.xlu0 %805
        %807 = vrot.lane.b32.xlu0 %v616, 112
        %v808 = vpop.permute.xlu0 %807
        %809 = vrot.lane.b32.xlu0 %v618, 112
        %v810 = vpop.permute.xlu0 %809
        %vm811 = vcmp.lt.s32.totalorder %v632, 112
        %v812 = vsel %vm811, %v804, %v808
        %v813 = vsel %vm811, %v806, %v810
        %v814 = vsel %vm811, %v808, %v804
        %v815 = vsel %vm811, %v810, %v806
        %v816 = vlaneseq
        %v817 = vshrl.u32 %v816, 7
        %v818 = vsub.s32 7, %v817
        %v819 = vrot.slane %v611, %v818
        %v820 = vlaneseq
        %v821 = vshrl.u32 %v820, 7
        %v822 = vsub.s32 7, %v821
        %v823 = vrot.slane %v612, %v822
        %v824 = vmul.f32 %v812, %v819
        %v825 = vmul.f32 %v814, %v823
        %v826 = vmul.f32 %v813, %v819
        %v827 = vmul.f32 %v815, %v823
        %v828 = vpack.c.bf16 %v826, %v824
        %v829 = vpack.c.bf16 %v827, %v825
        %830 = vst [vmem:[#allocation3 + $0x70] sm:$0xff] %v828
        %831 = vst [vmem:[#allocation3 + $0x78] sm:$0xff] %v829
        %832 = vrot.lane.b32.xlu0 %v615, 111
        %v833 = vpop.permute.xlu0 %832
        %834 = vrot.lane.b32.xlu0 %v617, 111
        %v835 = vpop.permute.xlu0 %834
        %836 = vrot.lane.b32.xlu0 %v616, 111
        %v837 = vpop.permute.xlu0 %836
        %838 = vrot.lane.b32.xlu0 %v618, 111
        %v839 = vpop.permute.xlu0 %838
        %vm840 = vcmp.lt.s32.totalorder %v632, 111
        %v841 = vsel %vm840, %v833, %v837
        %v842 = vsel %vm840, %v835, %v839
        %v843 = vsel %vm840, %v837, %v833
        %v844 = vsel %vm840, %v839, %v835
        %v845 = vlaneseq
        %v846 = vshrl.u32 %v845, 7
        %v847 = vsub.s32 0, %v846
        %v848 = vrot.slane %v613, %v847
        %v849 = vlaneseq
        %v850 = vshrl.u32 %v849, 7
        %v851 = vsub.s32 0, %v850
        %v852 = vrot.slane %v614, %v851
        %v853 = vmul.f32 %v841, %v848
        %v854 = vmul.f32 %v843, %v852
        %v855 = vmul.f32 %v842, %v848
        %v856 = vmul.f32 %v844, %v852
        %v857 = vpack.c.bf16 %v855, %v853
        %v858 = vpack.c.bf16 %v856, %v854
        %859 = vst [vmem:[#allocation3 + $0x80] sm:$0xff] %v857
        %860 = vst [vmem:[#allocation3 + $0x88] sm:$0xff] %v858
        %v861 = vld [vmem:[#allocation3] sm:$0xff]
        %v862 = vld [vmem:[#allocation3 + $0x8] sm:$0xff]
        %v863 = vld [vmem:[#allocation3 + $0x10] sm:$0xff]
        %v864 = vld [vmem:[#allocation3 + $0x18] sm:$0xff]
        %v865 = vld [vmem:[#allocation3 + $0x20] sm:$0xff]
        %v866 = vld [vmem:[#allocation3 + $0x28] sm:$0xff]
        %v867 = vld [vmem:[#allocation3 + $0x30] sm:$0xff]
        %v868 = vld [vmem:[#allocation3 + $0x38] sm:$0xff]
        %v869 = vld [vmem:[#allocation3 + $0x40] sm:$0xff]
        %v870 = vld [vmem:[#allocation3 + $0x48] sm:$0xff]
        %v871 = vld [vmem:[#allocation3 + $0x50] sm:$0xff]
        %v872 = vld [vmem:[#allocation3 + $0x58] sm:$0xff]
        %v873 = vld [vmem:[#allocation3 + $0x60] sm:$0xff]
        %v874 = vld [vmem:[#allocation3 + $0x68] sm:$0xff]
        %v875 = vld [vmem:[#allocation3 + $0x70] sm:$0xff]
        %v876 = vld [vmem:[#allocation3 + $0x78] sm:$0xff]
        %v877 = vld [vmem:[#allocation3 + $0x80] sm:$0xff]
        %v878 = vld [vmem:[#allocation3 + $0x88] sm:$0xff]
        %880 = vset.pattern.permute.xlu0 0
        %881 = vperm.xlu0 %880, %v621
        %v882 = vpop.permute.xlu0 %881
        %885 = vset.pattern.permute.xlu0 0
        %886 = vperm.xlu0 %885, %v622
        %v887 = vpop.permute.xlu0 %886
        %v891 = vunpack.c.l.b16 %v619
        %v892 = vunpack.c.h.b16 %v619
        %v893 = vunpack.c.l.b16 %v620
        %v894 = vunpack.c.h.b16 %v620
        %v895 = vpack.c.b16 %v893, %v891
        %v896 = vpack.c.b16 %v894, %v892
        %vm898 = vcmask 130048
        %v900 = vsel %vm898, %v896, 0
        %902 = vmatprep.subr.bf16.mxu0 %v862
        %903 = vmatpush1.bf16.msra.mxu0 %v861
        %904 = vmatprep.subr.bf16.mxu0 %v864
        %905 = vmatpush1.bf16.msra.mxu0 %v863
        %906 = vmatprep.subr.bf16.mxu0 %v866
        %907 = vmatpush1.bf16.msra.mxu0 %v865
        %908 = vmatprep.subr.bf16.mxu0 %v868
        %909 = vmatpush1.bf16.msra.mxu0 %v867
        %910 = vmatprep.subr.bf16.mxu0 %v870
        %911 = vmatpush1.bf16.msra.mxu0 %v869
        %912 = vmatprep.subr.bf16.mxu0 %v872
        %913 = vmatpush1.bf16.msra.mxu0 %v871
        %914 = vmatprep.subr.bf16.mxu0 %v874
        %915 = vmatpush1.bf16.msra.mxu0 %v873
        %916 = vmatprep.subr.bf16.mxu0 %v876
        %917 = vmatpush1.bf16.msra.mxu0 %v875
        %918 = vmatprep.subr.bf16.mxu0 %v878
        %919 = vmatpush1.bf16.msra.mxu0 %v877
        %920 = vmatprep.subr.bf16.mxu0 0
        %921 = vmatpush1.bf16.msra.mxu0 0
        %922 = vmatprep.subr.bf16.mxu0 0
        %923 = vmatpush1.bf16.msra.mxu0 0
        %924 = vmatprep.subr.bf16.mxu0 0
        %925 = vmatpush1.bf16.msra.mxu0 0
        %926 = vmatprep.subr.bf16.mxu0 0
        %927 = vmatpush1.bf16.msra.mxu0 0
        %928 = vmatprep.subr.bf16.mxu0 0
        %929 = vmatpush1.bf16.msra.mxu0 0
        %930 = vmatprep.subr.bf16.mxu0 0
        %931 = vmatpush1.bf16.msra.mxu0 0
        %932 = vmatprep.subr.bf16.mxu0 0
        %933 = vmatpush1.bf16.msra.mxu0 0
        %934 = vmatprep.mubr.bf16.mxu0 %v900
        %935 = vmatmul.mubr.bf16.gmra.mrb[0].mxu0 %v895
        %v936 = vpop.f32.mrb[0].mxu0
        %v937 = vadd.f32 %v882, %v936
        %v938 = vpop.f32.mrb[0].mxu0
        %v939 = vadd.f32 %v882, %v938
        %v940 = vpop.f32.mrb[0].mxu0
        %v941 = vadd.f32 %v887, %v940
        %v942 = vpop.f32.mrb[0].mxu0
        %v943 = vadd.f32 %v887, %v942
        %944 = vdwg.mxu0
        %v945 = vmax.f32 %v937, 0.0
        %v946 = vmax.f32 %v939, 0.0
        %v947 = vmax.f32 %v941, 0.0
        %v948 = vmax.f32 %v943, 0.0
        %v949 = vld [vmem:[%s578] sm:$0xff]
        %v950 = vld [vmem:[%s578 + $0x8] sm:$0xff]
        %v951 = vld [vmem:[%s583] sm:$0xff]
        %v952 = vld [vmem:[%s583 + $0x8] sm:$0xff]
        %953 = vrot.lane.b32.xlu0 %v945, 17
        %v954 = vpop.permute.xlu0 %953
        %955 = vrot.lane.b32.xlu0 %v947, 17
        %v956 = vpop.permute.xlu0 %955
        %957 = vrot.lane.b32.xlu0 %v946, 17
        %v958 = vpop.permute.xlu0 %957
        %959 = vrot.lane.b32.xlu0 %v948, 17
        %v960 = vpop.permute.xlu0 %959
        %v961 = vsel %vm633, %v954, %v958
        %v962 = vsel %vm633, %v956, %v960
        %v963 = vsel %vm633, %v958, %v954
        %v964 = vsel %vm633, %v960, %v956
        %v965 = vmul.f32 %v963, %v641
        %v966 = vmul.f32 %v961, %v645
        %v967 = vmul.f32 %v964, %v641
        %v968 = vmul.f32 %v962, %v645
        %v969 = vpack.c.bf16 %v967, %v965
        %v970 = vpack.c.bf16 %v968, %v966
        %971 = vst [vmem:[#allocation3] sm:$0xff] %v969
        %972 = vst [vmem:[#allocation3 + $0x8] sm:$0xff] %v970
        %973 = vrot.lane.b32.xlu0 %v945, 16
        %v974 = vpop.permute.xlu0 %973
        %975 = vrot.lane.b32.xlu0 %v947, 16
        %v976 = vpop.permute.xlu0 %975
        %977 = vrot.lane.b32.xlu0 %v946, 16
        %v978 = vpop.permute.xlu0 %977
        %979 = vrot.lane.b32.xlu0 %v948, 16
        %v980 = vpop.permute.xlu0 %979
        %v981 = vsel %vm662, %v974, %v978
        %v982 = vsel %vm662, %v976, %v980
        %v983 = vsel %vm662, %v978, %v974
        %v984 = vsel %vm662, %v980, %v976
        %v985 = vmul.f32 %v983, %v670
        %v986 = vmul.f32 %v981, %v674
        %v987 = vmul.f32 %v984, %v670
        %v988 = vmul.f32 %v982, %v674
        %v989 = vpack.c.bf16 %v987, %v985
        %v990 = vpack.c.bf16 %v988, %v986
        %991 = vst [vmem:[#allocation3 + $0x10] sm:$0xff] %v989
        %992 = vst [vmem:[#allocation3 + $0x18] sm:$0xff] %v990
        %993 = vrot.lane.b32.xlu0 %v945, 15
        %v994 = vpop.permute.xlu0 %993
        %995 = vrot.lane.b32.xlu0 %v947, 15
        %v996 = vpop.permute.xlu0 %995
        %997 = vrot.lane.b32.xlu0 %v946, 15
        %v998 = vpop.permute.xlu0 %997
        %999 = vrot.lane.b32.xlu0 %v948, 15
        %v1000 = vpop.permute.xlu0 %999
        %v1001 = vsel %vm691, %v994, %v998
        %v1002 = vsel %vm691, %v996, %v1000
        %v1003 = vsel %vm691, %v998, %v994
        %v1004 = vsel %vm691, %v1000, %v996
        %v1005 = vmul.f32 %v1003, %v699
        %v1006 = vmul.f32 %v1001, %v703
        %v1007 = vmul.f32 %v1004, %v699
        %v1008 = vmul.f32 %v1002, %v703
        %v1009 = vpack.c.bf16 %v1007, %v1005
        %v1010 = vpack.c.bf16 %v1008, %v1006
        %1011 = vst [vmem:[#allocation3 + $0x20] sm:$0xff] %v1009
        %1012 = vst [vmem:[#allocation3 + $0x28] sm:$0xff] %v1010
        %1013 = vrot.lane.b32.xlu0 %v945, 1
        %v1014 = vpop.permute.xlu0 %1013
        %1015 = vrot.lane.b32.xlu0 %v947, 1
        %v1016 = vpop.permute.xlu0 %1015
        %1017 = vrot.lane.b32.xlu0 %v946, 1
        %v1018 = vpop.permute.xlu0 %1017
        %1019 = vrot.lane.b32.xlu0 %v948, 1
        %v1020 = vpop.permute.xlu0 %1019
        %v1021 = vsel %vm720, %v1014, %v1018
        %v1022 = vsel %vm720, %v1016, %v1020
        %v1023 = vsel %vm720, %v1018, %v1014
        %v1024 = vsel %vm720, %v1020, %v1016
        %v1025 = vmul.f32 %v1023, %v728
        %v1026 = vmul.f32 %v1021, %v732
        %v1027 = vmul.f32 %v1024, %v728
        %v1028 = vmul.f32 %v1022, %v732
        %v1029 = vpack.c.bf16 %v1027, %v1025
        %v1030 = vpack.c.bf16 %v1028, %v1026
        %1031 = vst [vmem:[#allocation3 + $0x30] sm:$0xff] %v1029
        %1032 = vst [vmem:[#allocation3 + $0x38] sm:$0xff] %v1030
        %v1033 = vpack.c.bf16 %v947, %v945
        %v1034 = vpack.c.bf16 %v948, %v946
        %1035 = vst [vmem:[#allocation3 + $0x40] sm:$0xff] %v1033
        %1036 = vst [vmem:[#allocation3 + $0x48] sm:$0xff] %v1034
        %1037 = vrot.lane.b32.xlu0 %v945, 127
        %v1038 = vpop.permute.xlu0 %1037
        %1039 = vrot.lane.b32.xlu0 %v947, 127
        %v1040 = vpop.permute.xlu0 %1039
        %1041 = vrot.lane.b32.xlu0 %v946, 127
        %v1042 = vpop.permute.xlu0 %1041
        %1043 = vrot.lane.b32.xlu0 %v948, 127
        %v1044 = vpop.permute.xlu0 %1043
        %v1045 = vsel %vm753, %v1038, %v1042
        %v1046 = vsel %vm753, %v1040, %v1044
        %v1047 = vsel %vm753, %v1042, %v1038
        %v1048 = vsel %vm753, %v1044, %v1040
        %v1049 = vmul.f32 %v1045, %v761
        %v1050 = vmul.f32 %v1047, %v765
        %v1051 = vmul.f32 %v1046, %v761
        %v1052 = vmul.f32 %v1048, %v765
        %v1053 = vpack.c.bf16 %v1051, %v1049
        %v1054 = vpack.c.bf16 %v1052, %v1050
        %1055 = vst [vmem:[#allocation3 + $0x50] sm:$0xff] %v1053
        %1056 = vst [vmem:[#allocation3 + $0x58] sm:$0xff] %v1054
        %1057 = vrot.lane.b32.xlu0 %v945, 113
        %v1058 = vpop.permute.xlu0 %1057
        %1059 = vrot.lane.b32.xlu0 %v947, 113
        %v1060 = vpop.permute.xlu0 %1059
        %1061 = vrot.lane.b32.xlu0 %v946, 113
        %v1062 = vpop.permute.xlu0 %1061
        %1063 = vrot.lane.b32.xlu0 %v948, 113
        %v1064 = vpop.permute.xlu0 %1063
        %v1065 = vsel %vm782, %v1058, %v1062
        %v1066 = vsel %vm782, %v1060, %v1064
        %v1067 = vsel %vm782, %v1062, %v1058
        %v1068 = vsel %vm782, %v1064, %v1060
        %v1069 = vmul.f32 %v1065, %v790
        %v1070 = vmul.f32 %v1067, %v794
        %v1071 = vmul.f32 %v1066, %v790
        %v1072 = vmul.f32 %v1068, %v794
        %v1073 = vpack.c.bf16 %v1071, %v1069
        %v1074 = vpack.c.bf16 %v1072, %v1070
        %1075 = vst [vmem:[#allocation3 + $0x60] sm:$0xff] %v1073
        %1076 = vst [vmem:[#allocation3 + $0x68] sm:$0xff] %v1074
        %1077 = vrot.lane.b32.xlu0 %v945, 112
        %v1078 = vpop.permute.xlu0 %1077
        %1079 = vrot.lane.b32.xlu0 %v947, 112
        %v1080 = vpop.permute.xlu0 %1079
        %1081 = vrot.lane.b32.xlu0 %v946, 112
        %v1082 = vpop.permute.xlu0 %1081
        %1083 = vrot.lane.b32.xlu0 %v948, 112
        %v1084 = vpop.permute.xlu0 %1083
        %v1085 = vsel %vm811, %v1078, %v1082
        %v1086 = vsel %vm811, %v1080, %v1084
        %v1087 = vsel %vm811, %v1082, %v1078
        %v1088 = vsel %vm811, %v1084, %v1080
        %v1089 = vmul.f32 %v1085, %v819
        %v1090 = vmul.f32 %v1087, %v823
        %v1091 = vmul.f32 %v1086, %v819
        %v1092 = vmul.f32 %v1088, %v823
        %v1093 = vpack.c.bf16 %v1091, %v1089
        %v1094 = vpack.c.bf16 %v1092, %v1090
        %1095 = vst [vmem:[#allocation3 + $0x70] sm:$0xff] %v1093
        %1096 = vst [vmem:[#allocation3 + $0x78] sm:$0xff] %v1094
        %1097 = vrot.lane.b32.xlu0 %v945, 111
        %v1098 = vpop.permute.xlu0 %1097
        %1099 = vrot.lane.b32.xlu0 %v947, 111
        %v1100 = vpop.permute.xlu0 %1099
        %1101 = vrot.lane.b32.xlu0 %v946, 111
        %v1102 = vpop.permute.xlu0 %1101
        %1103 = vrot.lane.b32.xlu0 %v948, 111
        %v1104 = vpop.permute.xlu0 %1103
        %v1105 = vsel %vm840, %v1098, %v1102
        %v1106 = vsel %vm840, %v1100, %v1104
        %v1107 = vsel %vm840, %v1102, %v1098
        %v1108 = vsel %vm840, %v1104, %v1100
        %v1109 = vmul.f32 %v1105, %v848
        %v1110 = vmul.f32 %v1107, %v852
        %v1111 = vmul.f32 %v1106, %v848
        %v1112 = vmul.f32 %v1108, %v852
        %v1113 = vpack.c.bf16 %v1111, %v1109
        %v1114 = vpack.c.bf16 %v1112, %v1110
        %1115 = vst [vmem:[#allocation3 + $0x80] sm:$0xff] %v1113
        %1116 = vst [vmem:[#allocation3 + $0x88] sm:$0xff] %v1114
        %v1117 = vld [vmem:[#allocation3] sm:$0xff]
        %v1118 = vld [vmem:[#allocation3 + $0x8] sm:$0xff]
        %v1119 = vld [vmem:[#allocation3 + $0x10] sm:$0xff]
        %v1120 = vld [vmem:[#allocation3 + $0x18] sm:$0xff]
        %v1121 = vld [vmem:[#allocation3 + $0x20] sm:$0xff]
        %v1122 = vld [vmem:[#allocation3 + $0x28] sm:$0xff]
        %v1123 = vld [vmem:[#allocation3 + $0x30] sm:$0xff]
        %v1124 = vld [vmem:[#allocation3 + $0x38] sm:$0xff]
        %v1125 = vld [vmem:[#allocation3 + $0x40] sm:$0xff]
        %v1126 = vld [vmem:[#allocation3 + $0x48] sm:$0xff]
        %v1127 = vld [vmem:[#allocation3 + $0x50] sm:$0xff]
        %v1128 = vld [vmem:[#allocation3 + $0x58] sm:$0xff]
        %v1129 = vld [vmem:[#allocation3 + $0x60] sm:$0xff]
        %v1130 = vld [vmem:[#allocation3 + $0x68] sm:$0xff]
        %v1131 = vld [vmem:[#allocation3 + $0x70] sm:$0xff]
        %v1132 = vld [vmem:[#allocation3 + $0x78] sm:$0xff]
        %v1133 = vld [vmem:[#allocation3 + $0x80] sm:$0xff]
        %v1134 = vld [vmem:[#allocation3 + $0x88] sm:$0xff]
        %1136 = vset.pattern.permute.xlu0 0
        %1137 = vperm.xlu0 %1136, %v951
        %v1138 = vpop.permute.xlu0 %1137
        %1141 = vset.pattern.permute.xlu0 0
        %1142 = vperm.xlu0 %1141, %v952
        %v1143 = vpop.permute.xlu0 %1142
        %v1147 = vunpack.c.l.b16 %v949
        %v1148 = vunpack.c.h.b16 %v949
        %v1149 = vunpack.c.l.b16 %v950
        %v1150 = vunpack.c.h.b16 %v950
        %v1151 = vpack.c.b16 %v1149, %v1147
        %v1152 = vpack.c.b16 %v1150, %v1148
        %v1155 = vsel %vm898, %v1152, 0
        %1157 = vmatprep.subr.bf16.mxu0 %v1118
        %1158 = vmatpush1.bf16.msra.mxu0 %v1117
        %1159 = vmatprep.subr.bf16.mxu0 %v1120
        %1160 = vmatpush1.bf16.msra.mxu0 %v1119
        %1161 = vmatprep.subr.bf16.mxu0 %v1122
        %1162 = vmatpush1.bf16.msra.mxu0 %v1121
        %1163 = vmatprep.subr.bf16.mxu0 %v1124
        %1164 = vmatpush1.bf16.msra.mxu0 %v1123
        %1165 = vmatprep.subr.bf16.mxu0 %v1126
        %1166 = vmatpush1.bf16.msra.mxu0 %v1125
        %1167 = vmatprep.subr.bf16.mxu0 %v1128
        %1168 = vmatpush1.bf16.msra.mxu0 %v1127
        %1169 = vmatprep.subr.bf16.mxu0 %v1130
        %1170 = vmatpush1.bf16.msra.mxu0 %v1129
        %1171 = vmatprep.subr.bf16.mxu0 %v1132
        %1172 = vmatpush1.bf16.msra.mxu0 %v1131
        %1173 = vmatprep.subr.bf16.mxu0 %v1134
        %1174 = vmatpush1.bf16.msra.mxu0 %v1133
        %1175 = vmatprep.subr.bf16.mxu0 0
        %1176 = vmatpush1.bf16.msra.mxu0 0
        %1177 = vmatprep.subr.bf16.mxu0 0
        %1178 = vmatpush1.bf16.msra.mxu0 0
        %1179 = vmatprep.subr.bf16.mxu0 0
        %1180 = vmatpush1.bf16.msra.mxu0 0
        %1181 = vmatprep.subr.bf16.mxu0 0
        %1182 = vmatpush1.bf16.msra.mxu0 0
        %1183 = vmatprep.subr.bf16.mxu0 0
        %1184 = vmatpush1.bf16.msra.mxu0 0
        %1185 = vmatprep.subr.bf16.mxu0 0
        %1186 = vmatpush1.bf16.msra.mxu0 0
        %1187 = vmatprep.subr.bf16.mxu0 0
        %1188 = vmatpush1.bf16.msra.mxu0 0
        %1189 = vmatprep.mubr.bf16.mxu0 %v1155
        %1190 = vmatmul.mubr.bf16.gmra.mrb[0].mxu0 %v1151
        %v1191 = vpop.f32.mrb[0].mxu0
        %v1192 = vadd.f32 %v1138, %v1191
        %v1193 = vpop.f32.mrb[0].mxu0
        %v1194 = vadd.f32 %v1138, %v1193
        %v1195 = vpop.f32.mrb[0].mxu0
        %v1196 = vadd.f32 %v1143, %v1195
        %v1197 = vpop.f32.mrb[0].mxu0
        %v1198 = vadd.f32 %v1143, %v1197
        %1199 = vdwg.mxu0
        %v1200 = vadd.f32 %v1192, %v1194
        %1201 = vadd.xlane.f32.xlu0 %v1200
        %v1202 = vpop.xlane.xlu0 %1201
        %v1203 = vadd.f32 %v1196, %v1198
        %1204 = vadd.xlane.f32.xlu0 %v1203
        %v1205 = vpop.xlane.xlu0 %1204
        %v1206 = vrcp.pop 256.0
        %v1207 = vmul.f32 %v1202, %v1206
        %v1208 = vmul.f32 %v1205, %v1206
        %v1209 = vpack.c.bf16 %v1208, %v1207
        %v1210 = vld [vmem:[%s479] sm:$0x3]
        %v1211 = vld [vmem:[%s587] sm:$0xf]
        %1213 = vset.pattern.permute.xlu0 0
        %1214 = vperm.xlu0 %1213, %v1211
        %v1215 = vpop.permute.xlu0 %1214
        %v1218 = vsel %vm898, %v1210, 0
        %1220 = vmatprep.subr.bf16.mxu0 0
        %1221 = vmatpush1.bf16.msra.mxu0 %v1209
        %1222 = vmatprep.subr.bf16.mxu0 0
        %1223 = vmatpush1.bf16.msra.mxu0 0
        %1224 = vmatprep.subr.bf16.mxu0 0
        %1225 = vmatpush1.bf16.msra.mxu0 0
        %1226 = vmatprep.subr.bf16.mxu0 0
        %1227 = vmatpush1.bf16.msra.mxu0 0
        %1228 = vmatprep.subr.bf16.mxu0 0
        %1229 = vmatpush1.bf16.msra.mxu0 0
        %1230 = vmatprep.subr.bf16.mxu0 0
        %1231 = vmatpush1.bf16.msra.mxu0 0
        %1232 = vmatprep.subr.bf16.mxu0 0
        %1233 = vmatpush1.bf16.msra.mxu0 0
        %1234 = vmatprep.subr.bf16.mxu0 0
        %1235 = vmatpush1.bf16.msra.mxu0 0
        %1236 = vmatprep.subr.bf16.mxu0 0
        %1237 = vmatpush1.bf16.msra.mxu0 0
        %1238 = vmatprep.subr.bf16.mxu0 0
        %1239 = vmatpush1.bf16.msra.mxu0 0
        %1240 = vmatprep.subr.bf16.mxu0 0
        %1241 = vmatpush1.bf16.msra.mxu0 0
        %1242 = vmatprep.subr.bf16.mxu0 0
        %1243 = vmatpush1.bf16.msra.mxu0 0
        %1244 = vmatprep.subr.bf16.mxu0 0
        %1245 = vmatpush1.bf16.msra.mxu0 0
        %1246 = vmatprep.subr.bf16.mxu0 0
        %1247 = vmatpush1.bf16.msra.mxu0 0
        %1248 = vmatprep.subr.bf16.mxu0 0
        %1249 = vmatpush1.bf16.msra.mxu0 0
        %1250 = vmatprep.subr.bf16.mxu0 0
        %1251 = vmatpush1.bf16.msra.mxu0 0
        %1252 = vmatprep.mubr.bf16.mxu0 0
        %1253 = vmatmul.mubr.bf16.gmra.mrb[0].mxu0 %v1218
        %v1254 = vpop.f32.mrb[0].mxu0
        %v1255 = vadd.f32 %v1215, %v1254
        %v1256 = vpop.f32.mrb[0].mxu0
        %v1257 = vpop.f32.mrb[0].mxu0
        %v1258 = vpop.f32.mrb[0].mxu0
        %1259 = vdwg.mxu0
        %v1260 = vmax.f32 %v1255, 0.0
        %v1261 = vld [vmem:[%s592] sm:$0xf]
        %v1262 = vld [vmem:[%s592 + $0x4] sm:$0xf]
        %v1263 = vpack.c.bf16 %v1260, %v1260
        %v1264 = vld [vmem:[%s597] sm:$0xff]
        %v1265 = vld [vmem:[%s597 + $0x8] sm:$0xff]
        %1267 = vset.pattern.permute.xlu0 0
        %1268 = vperm.xlu0 %1267, %v1264
        %v1269 = vpop.permute.xlu0 %1268
        %1272 = vset.pattern.permute.xlu0 0
        %1273 = vperm.xlu0 %1272, %v1265
        %v1274 = vpop.permute.xlu0 %1273
        %v1278 = vunpack.c.l.b16 %v1261
        %v1279 = vunpack.c.l.b16 %v1262
        %v1280 = vpack.c.b16 %v1279, %v1278
        %vm1281 = vcmask 31744
        %v1283 = vsel %vm1281, %v1280, 0
        %vm1285 = vcmask 1041408
        %v1287 = vsel %vm1285, %v1263, 0
        %1289 = vmatprep.subr.bf16.mxu0 0
        %1290 = vmatpush1.bf16.msra.mxu0 %v1287
        %1291 = vmatprep.subr.bf16.mxu0 0
        %1292 = vmatpush1.bf16.msra.mxu0 0
        %1293 = vmatprep.subr.bf16.mxu0 0
        %1294 = vmatpush1.bf16.msra.mxu0 0
        %1295 = vmatprep.subr.bf16.mxu0 0
        %1296 = vmatpush1.bf16.msra.mxu0 0
        %1297 = vmatprep.subr.bf16.mxu0 0
        %1298 = vmatpush1.bf16.msra.mxu0 0
        %1299 = vmatprep.subr.bf16.mxu0 0
        %1300 = vmatpush1.bf16.msra.mxu0 0
        %1301 = vmatprep.subr.bf16.mxu0 0
        %1302 = vmatpush1.bf16.msra.mxu0 0
        %1303 = vmatprep.subr.bf16.mxu0 0
        %1304 = vmatpush1.bf16.msra.mxu0 0
        %1305 = vmatprep.subr.bf16.mxu0 0
        %1306 = vmatpush1.bf16.msra.mxu0 0
        %1307 = vmatprep.subr.bf16.mxu0 0
        %1308 = vmatpush1.bf16.msra.mxu0 0
        %1309 = vmatprep.subr.bf16.mxu0 0
        %1310 = vmatpush1.bf16.msra.mxu0 0
        %1311 = vmatprep.subr.bf16.mxu0 0
        %1312 = vmatpush1.bf16.msra.mxu0 0
        %1313 = vmatprep.subr.bf16.mxu0 0
        %1314 = vmatpush1.bf16.msra.mxu0 0
        %1315 = vmatprep.subr.bf16.mxu0 0
        %1316 = vmatpush1.bf16.msra.mxu0 0
        %1317 = vmatprep.subr.bf16.mxu0 0
        %1318 = vmatpush1.bf16.msra.mxu0 0
        %1319 = vmatprep.subr.bf16.mxu0 0
        %1320 = vmatpush1.bf16.msra.mxu0 0
        %1321 = vmatprep.mubr.bf16.mxu0 0
        %1322 = vmatmul.mubr.bf16.gmra.mrb[0].mxu0 %v1283
        %v1323 = vpop.f32.mrb[0].mxu0
        %v1324 = vadd.f32 %v1269, %v1323
        %v1325 = vpop.f32.mrb[0].mxu0
        %v1326 = vpop.f32.mrb[0].mxu0
        %v1327 = vadd.f32 %v1274, %v1326
        %v1328 = vpop.f32.mrb[0].mxu0
        %1329 = vdwg.mxu0
        %v1330 = vxor.u32 %v1324, 2147483648
        %v1331 = vxor.u32 %v1327, 2147483648
        %v1332 = vmul.f32 %v1330, 1.442695
        %v1333 = vpow.pop %v1332
        %v1334 = vmul.f32 %v1331, 1.442695
        %v1335 = vpow.pop %v1334
        %v1336 = vadd.f32 %v1333, 1.0
        %v1337 = vadd.f32 %v1335, 1.0
        %v1338 = vrcp.pop %v1336
        %v1339 = vmul.f32 1.0, %v1338
        %v1340 = vrcp.pop %v1337
        %v1341 = vmul.f32 1.0, %v1340
        %1343 = vset.pattern.permute.xlu0 0
        %1344 = vperm.xlu0 %1343, %v1339
        %v1345 = vpop.permute.xlu0 %1344
        %1348 = vset.pattern.permute.xlu0 0
        %1349 = vperm.xlu0 %1348, %v1341
        %v1350 = vpop.permute.xlu0 %1349
        %v1352 = vmul.f32 %v1192, %v1345
        %v1353 = vmul.f32 %v1194, %v1345
        %v1354 = vmul.f32 %v1196, %v1350
        %v1355 = vmul.f32 %v1198, %v1350
        %v1356 = vadd.f32 %v1352, %v615
        %v1357 = vadd.f32 %v1353, %v616
        %v1358 = vadd.f32 %v1354, %v617
        %v1359 = vadd.f32 %v1355, %v618
        %1360 = vst [vmem:[#allocation2] sm:$0xff] %v1356
        %1361 = vst [vmem:[#allocation2 + $0x8] sm:$0xff] %v1357
        %1362 = vst [vmem:[#allocation2 + $0x10] sm:$0xff] %v1358
        %1363 = vst [vmem:[#allocation2 + $0x18] sm:$0xff] %v1359
        %p1364 = scmp.eq.s32.totalorder %s34, 1
        // Predicated region
        $region77: #{tpu_custom_call.1} parent=67 // pred_check
          %p1365 = pneg %p1364
        $region78: #{tpu_custom_call.1} parent=67 // pred_check_branch
          %1367 = sbr.rel (%p1365) target = $region80
        $region79: #{tpu_custom_call.1} parent=67 // pred_region
          %v1368 = vld [vmem:[%s10] sm:$0xff]
          %v1369 = vld [vmem:[%s10 + $0x8] sm:$0xff]
          %v1370 = vld [vmem:[%s11] sm:$0xff]
          %v1371 = vld [vmem:[%s11 + $0x8] sm:$0xff]
          %1372 = vrot.lane.b32.xlu0 %v1356, 17
          %v1373 = vpop.permute.xlu0 %1372
          %1374 = vrot.lane.b32.xlu0 %v1358, 17
          %v1375 = vpop.permute.xlu0 %1374
          %1376 = vrot.lane.b32.xlu0 %v1357, 17
          %v1377 = vpop.permute.xlu0 %1376
          %1378 = vrot.lane.b32.xlu0 %v1359, 17
          %v1379 = vpop.permute.xlu0 %1378
          %v1380 = vsel %vm633, %v1373, %v1377
          %v1381 = vsel %vm633, %v1375, %v1379
          %v1382 = vsel %vm633, %v1377, %v1373
          %v1383 = vsel %vm633, %v1379, %v1375
          %v1384 = vmul.f32 %v1382, %v641
          %v1385 = vmul.f32 %v1380, %v645
          %v1386 = vmul.f32 %v1383, %v641
          %v1387 = vmul.f32 %v1381, %v645
          %v1388 = vpack.c.bf16 %v1386, %v1384
          %v1389 = vpack.c.bf16 %v1387, %v1385
          %1390 = vst [vmem:[#allocation3] sm:$0xff] %v1388
          %1391 = vst [vmem:[#allocation3 + $0x8] sm:$0xff] %v1389
          %1392 = vrot.lane.b32.xlu0 %v1356, 16
          %v1393 = vpop.permute.xlu0 %1392
          %1394 = vrot.lane.b32.xlu0 %v1358, 16
          %v1395 = vpop.permute.xlu0 %1394
          %1396 = vrot.lane.b32.xlu0 %v1357, 16
          %v1397 = vpop.permute.xlu0 %1396
          %1398 = vrot.lane.b32.xlu0 %v1359, 16
          %v1399 = vpop.permute.xlu0 %1398
          %v1400 = vsel %vm662, %v1393, %v1397
          %v1401 = vsel %vm662, %v1395, %v1399
          %v1402 = vsel %vm662, %v1397, %v1393
          %v1403 = vsel %vm662, %v1399, %v1395
          %v1404 = vmul.f32 %v1402, %v670
          %v1405 = vmul.f32 %v1400, %v674
          %v1406 = vmul.f32 %v1403, %v670
          %v1407 = vmul.f32 %v1401, %v674
          %v1408 = vpack.c.bf16 %v1406, %v1404
          %v1409 = vpack.c.bf16 %v1407, %v1405
          %1410 = vst [vmem:[#allocation3 + $0x10] sm:$0xff] %v1408
          %1411 = vst [vmem:[#allocation3 + $0x18] sm:$0xff] %v1409
          %1412 = vrot.lane.b32.xlu0 %v1356, 15
          %v1413 = vpop.permute.xlu0 %1412
          %1414 = vrot.lane.b32.xlu0 %v1358, 15
          %v1415 = vpop.permute.xlu0 %1414
          %1416 = vrot.lane.b32.xlu0 %v1357, 15
          %v1417 = vpop.permute.xlu0 %1416
          %1418 = vrot.lane.b32.xlu0 %v1359, 15
          %v1419 = vpop.permute.xlu0 %1418
          %v1420 = vsel %vm691, %v1413, %v1417
          %v1421 = vsel %vm691, %v1415, %v1419
          %v1422 = vsel %vm691, %v1417, %v1413
          %v1423 = vsel %vm691, %v1419, %v1415
          %v1424 = vmul.f32 %v1422, %v699
          %v1425 = vmul.f32 %v1420, %v703
          %v1426 = vmul.f32 %v1423, %v699
          %v1427 = vmul.f32 %v1421, %v703
          %v1428 = vpack.c.bf16 %v1426, %v1424
          %v1429 = vpack.c.bf16 %v1427, %v1425
          %1430 = vst [vmem:[#allocation3 + $0x20] sm:$0xff] %v1428
          %1431 = vst [vmem:[#allocation3 + $0x28] sm:$0xff] %v1429
          %1432 = vrot.lane.b32.xlu0 %v1356, 1
          %v1433 = vpop.permute.xlu0 %1432
          %1434 = vrot.lane.b32.xlu0 %v1358, 1
          %v1435 = vpop.permute.xlu0 %1434
          %1436 = vrot.lane.b32.xlu0 %v1357, 1
          %v1437 = vpop.permute.xlu0 %1436
          %1438 = vrot.lane.b32.xlu0 %v1359, 1
          %v1439 = vpop.permute.xlu0 %1438
          %v1440 = vsel %vm720, %v1433, %v1437
          %v1441 = vsel %vm720, %v1435, %v1439
          %v1442 = vsel %vm720, %v1437, %v1433
          %v1443 = vsel %vm720, %v1439, %v1435
          %v1444 = vmul.f32 %v1442, %v728
          %v1445 = vmul.f32 %v1440, %v732
          %v1446 = vmul.f32 %v1443, %v728
          %v1447 = vmul.f32 %v1441, %v732
          %v1448 = vpack.c.bf16 %v1446, %v1444
          %v1449 = vpack.c.bf16 %v1447, %v1445
          %1450 = vst [vmem:[#allocation3 + $0x30] sm:$0xff] %v1448
          %1451 = vst [vmem:[#allocation3 + $0x38] sm:$0xff] %v1449
          %v1452 = vpack.c.bf16 %v1358, %v1356
          %v1453 = vpack.c.bf16 %v1359, %v1357
          %1454 = vst [vmem:[#allocation3 + $0x40] sm:$0xff] %v1452
          %1455 = vst [vmem:[#allocation3 + $0x48] sm:$0xff] %v1453
          %1456 = vrot.lane.b32.xlu0 %v1356, 127
          %v1457 = vpop.permute.xlu0 %1456
          %1458 = vrot.lane.b32.xlu0 %v1358, 127
          %v1459 = vpop.permute.xlu0 %1458
          %1460 = vrot.lane.b32.xlu0 %v1357, 127
          %v1461 = vpop.permute.xlu0 %1460
          %1462 = vrot.lane.b32.xlu0 %v1359, 127
          %v1463 = vpop.permute.xlu0 %1462
          %v1464 = vsel %vm753, %v1457, %v1461
          %v1465 = vsel %vm753, %v1459, %v1463
          %v1466 = vsel %vm753, %v1461, %v1457
          %v1467 = vsel %vm753, %v1463, %v1459
          %v1468 = vmul.f32 %v1464, %v761
          %v1469 = vmul.f32 %v1466, %v765
          %v1470 = vmul.f32 %v1465, %v761
          %v1471 = vmul.f32 %v1467, %v765
          %v1472 = vpack.c.bf16 %v1470, %v1468
          %v1473 = vpack.c.bf16 %v1471, %v1469
          %1474 = vst [vmem:[#allocation3 + $0x50] sm:$0xff] %v1472
          %1475 = vst [vmem:[#allocation3 + $0x58] sm:$0xff] %v1473
          %1476 = vrot.lane.b32.xlu0 %v1356, 113
          %v1477 = vpop.permute.xlu0 %1476
          %1478 = vrot.lane.b32.xlu0 %v1358, 113
          %v1479 = vpop.permute.xlu0 %1478
          %1480 = vrot.lane.b32.xlu0 %v1357, 113
          %v1481 = vpop.permute.xlu0 %1480
          %1482 = vrot.lane.b32.xlu0 %v1359, 113
          %v1483 = vpop.permute.xlu0 %1482
          %v1484 = vsel %vm782, %v1477, %v1481
          %v1485 = vsel %vm782, %v1479, %v1483
          %v1486 = vsel %vm782, %v1481, %v1477
          %v1487 = vsel %vm782, %v1483, %v1479
          %v1488 = vmul.f32 %v1484, %v790
          %v1489 = vmul.f32 %v1486, %v794
          %v1490 = vmul.f32 %v1485, %v790
          %v1491 = vmul.f32 %v1487, %v794
          %v1492 = vpack.c.bf16 %v1490, %v1488
          %v1493 = vpack.c.bf16 %v1491, %v1489
          %1494 = vst [vmem:[#allocation3 + $0x60] sm:$0xff] %v1492
          %1495 = vst [vmem:[#allocation3 + $0x68] sm:$0xff] %v1493
          %1496 = vrot.lane.b32.xlu0 %v1356, 112
          %v1497 = vpop.permute.xlu0 %1496
          %1498 = vrot.lane.b32.xlu0 %v1358, 112
          %v1499 = vpop.permute.xlu0 %1498
          %1500 = vrot.lane.b32.xlu0 %v1357, 112
          %v1501 = vpop.permute.xlu0 %1500
          %1502 = vrot.lane.b32.xlu0 %v1359, 112
          %v1503 = vpop.permute.xlu0 %1502
          %v1504 = vsel %vm811, %v1497, %v1501
          %v1505 = vsel %vm811, %v1499, %v1503
          %v1506 = vsel %vm811, %v1501, %v1497
          %v1507 = vsel %vm811, %v1503, %v1499
          %v1508 = vmul.f32 %v1504, %v819
          %v1509 = vmul.f32 %v1506, %v823
          %v1510 = vmul.f32 %v1505, %v819
          %v1511 = vmul.f32 %v1507, %v823
          %v1512 = vpack.c.bf16 %v1510, %v1508
          %v1513 = vpack.c.bf16 %v1511, %v1509
          %1514 = vst [vmem:[#allocation3 + $0x70] sm:$0xff] %v1512
          %1515 = vst [vmem:[#allocation3 + $0x78] sm:$0xff] %v1513
          %1516 = vrot.lane.b32.xlu0 %v1356, 111
          %v1517 = vpop.permute.xlu0 %1516
          %1518 = vrot.lane.b32.xlu0 %v1358, 111
          %v1519 = vpop.permute.xlu0 %1518
          %1520 = vrot.lane.b32.xlu0 %v1357, 111
          %v1521 = vpop.permute.xlu0 %1520
          %1522 = vrot.lane.b32.xlu0 %v1359, 111
          %v1523 = vpop.permute.xlu0 %1522
          %v1524 = vsel %vm840, %v1517, %v1521
          %v1525 = vsel %vm840, %v1519, %v1523
          %v1526 = vsel %vm840, %v1521, %v1517
          %v1527 = vsel %vm840, %v1523, %v1519
          %v1528 = vmul.f32 %v1524, %v848
          %v1529 = vmul.f32 %v1526, %v852
          %v1530 = vmul.f32 %v1525, %v848
          %v1531 = vmul.f32 %v1527, %v852
          %v1532 = vpack.c.bf16 %v1530, %v1528
          %v1533 = vpack.c.bf16 %v1531, %v1529
          %1534 = vst [vmem:[#allocation3 + $0x80] sm:$0xff] %v1532
          %1535 = vst [vmem:[#allocation3 + $0x88] sm:$0xff] %v1533
          %v1536 = vld [vmem:[#allocation3] sm:$0xff]
          %v1537 = vld [vmem:[#allocation3 + $0x8] sm:$0xff]
          %v1538 = vld [vmem:[#allocation3 + $0x10] sm:$0xff]
          %v1539 = vld [vmem:[#allocation3 + $0x18] sm:$0xff]
          %v1540 = vld [vmem:[#allocation3 + $0x20] sm:$0xff]
          %v1541 = vld [vmem:[#allocation3 + $0x28] sm:$0xff]
          %v1542 = vld [vmem:[#allocation3 + $0x30] sm:$0xff]
          %v1543 = vld [vmem:[#allocation3 + $0x38] sm:$0xff]
          %v1544 = vld [vmem:[#allocation3 + $0x40] sm:$0xff]
          %v1545 = vld [vmem:[#allocation3 + $0x48] sm:$0xff]
          %v1546 = vld [vmem:[#allocation3 + $0x50] sm:$0xff]
          %v1547 = vld [vmem:[#allocation3 + $0x58] sm:$0xff]
          %v1548 = vld [vmem:[#allocation3 + $0x60] sm:$0xff]
          %v1549 = vld [vmem:[#allocation3 + $0x68] sm:$0xff]
          %v1550 = vld [vmem:[#allocation3 + $0x70] sm:$0xff]
          %v1551 = vld [vmem:[#allocation3 + $0x78] sm:$0xff]
          %v1552 = vld [vmem:[#allocation3 + $0x80] sm:$0xff]
          %v1553 = vld [vmem:[#allocation3 + $0x88] sm:$0xff]
          %1555 = vset.pattern.permute.xlu0 0
          %1556 = vperm.xlu0 %1555, %v1370
          %v1557 = vpop.permute.xlu0 %1556
          %1560 = vset.pattern.permute.xlu0 0
          %1561 = vperm.xlu0 %1560, %v1371
          %v1562 = vpop.permute.xlu0 %1561
          %v1566 = vunpack.c.l.b16 %v1368
          %v1567 = vunpack.c.h.b16 %v1368
          %v1568 = vunpack.c.l.b16 %v1369
          %v1569 = vunpack.c.h.b16 %v1369
          %v1570 = vpack.c.b16 %v1568, %v1566
          %v1571 = vpack.c.b16 %v1569, %v1567
          %v1574 = vsel %vm898, %v1571, 0
          %1576 = vmatprep.subr.bf16.mxu0 %v1537
          %1577 = vmatpush1.bf16.msra.mxu0 %v1536
          %1578 = vmatprep.subr.bf16.mxu0 %v1539
          %1579 = vmatpush1.bf16.msra.mxu0 %v1538
          %1580 = vmatprep.subr.bf16.mxu0 %v1541
          %1581 = vmatpush1.bf16.msra.mxu0 %v1540
          %1582 = vmatprep.subr.bf16.mxu0 %v1543
          %1583 = vmatpush1.bf16.msra.mxu0 %v1542
          %1584 = vmatprep.subr.bf16.mxu0 %v1545
          %1585 = vmatpush1.bf16.msra.mxu0 %v1544
          %1586 = vmatprep.subr.bf16.mxu0 %v1547
          %1587 = vmatpush1.bf16.msra.mxu0 %v1546
          %1588 = vmatprep.subr.bf16.mxu0 %v1549
          %1589 = vmatpush1.bf16.msra.mxu0 %v1548
          %1590 = vmatprep.subr.bf16.mxu0 %v1551
          %1591 = vmatpush1.bf16.msra.mxu0 %v1550
          %1592 = vmatprep.subr.bf16.mxu0 %v1553
          %1593 = vmatpush1.bf16.msra.mxu0 %v1552
          %1594 = vmatprep.subr.bf16.mxu0 0
          %1595 = vmatpush1.bf16.msra.mxu0 0
          %1596 = vmatprep.subr.bf16.mxu0 0
          %1597 = vmatpush1.bf16.msra.mxu0 0
          %1598 = vmatprep.subr.bf16.mxu0 0
          %1599 = vmatpush1.bf16.msra.mxu0 0
          %1600 = vmatprep.subr.bf16.mxu0 0
          %1601 = vmatpush1.bf16.msra.mxu0 0
          %1602 = vmatprep.subr.bf16.mxu0 0
          %1603 = vmatpush1.bf16.msra.mxu0 0
          %1604 = vmatprep.subr.bf16.mxu0 0
          %1605 = vmatpush1.bf16.msra.mxu0 0
          %1606 = vmatprep.subr.bf16.mxu0 0
          %1607 = vmatpush1.bf16.msra.mxu0 0
          %1608 = vmatprep.mubr.bf16.mxu0 %v1574
          %1609 = vmatmul.mubr.bf16.gmra.mrb[0].mxu0 %v1570
          %v1610 = vpop.f32.mrb[0].mxu0
          %v1611 = vadd.f32 %v1557, %v1610
          %v1612 = vpop.f32.mrb[0].mxu0
          %v1613 = vadd.f32 %v1557, %v1612
          %v1614 = vpop.f32.mrb[0].mxu0
          %v1615 = vadd.f32 %v1562, %v1614
          %v1616 = vpop.f32.mrb[0].mxu0
          %v1617 = vadd.f32 %v1562, %v1616
          %1618 = vdwg.mxu0
          %v1619 = vld [vmem:[%s563] sm:$0xff]
          %v1620 = vld [vmem:[%s563 + $0x8] sm:$0xff]
          %v1621 = vld [vmem:[%s563 + $0x10] sm:$0xff]
          %v1622 = vld [vmem:[%s563 + $0x18] sm:$0xff]
          %v1623 = vadd.f32 %v1611, %v1619
          %v1624 = vadd.f32 %v1613, %v1620
          %v1625 = vadd.f32 %v1615, %v1621
          %v1626 = vadd.f32 %v1617, %v1622
          %1627 = vst [vmem:[%s558] sm:$0xff] %v1623
          %1628 = vst [vmem:[%s558 + $0x8] sm:$0xff] %v1624
          %1629 = vst [vmem:[%s558 + $0x10] sm:$0xff] %v1625
          %1630 = vst [vmem:[%s558 + $0x18] sm:$0xff] %v1626
        $region80: #{tpu_custom_call.1} parent=67 // pred_fallthru
          _
        %s1631 = sand.u32 %s346, 1
        %s1632 = scalar_lea.sflag [#allocation6], %s1631
        %s1633 = sand.u32 %s346, 1
        %s1634 = smul.addr %s1633, 32
        %s1635 = scalar_lea.vmem [#allocation7], %s1634
        // Predicated region
        $region81: #{tpu_custom_call.1} parent=67 // pred_check
          %p1636 = pneg %p356
        $region82: #{tpu_custom_call.1} parent=67 // pred_check_branch
          %1638 = sbr.rel (%p1636) target = $region84
        $region83: #{tpu_custom_call.1} parent=67 // pred_region
          %s1640 = ssub.s32 512, 512
          %1641 = vsyncadd %s1632, %s1640
          %s1642 = smul.addr %s33, 4
          %s1643 = smul.addr %s1642, 128
          %s1644 = scalar_lea.hbm %s12, %s1643
          %s1645 = sshll.u32 %s1635, 4
          %s1646 = int_to_ptr.vmem [resolvable:$true] %s1645
          %1651 = dma.vmem_to_hbm [thread:$0]  %s1646, 512, %s1644, %s1632, 256, 256, 16
        $region84: #{tpu_custom_call.1} parent=67 // pred_fallthru
          _
      $region68: #{tpu_custom_call.1} parent=5 // pred_fallthru
        _
      %p1652 = scmp.le.s32.totalorder 2, %s24
      // Predicated region
      $region85: #{tpu_custom_call.1} parent=5 // pred_check
        %p1653 = pneg %p1652
      $region86: #{tpu_custom_call.1} parent=5 // pred_check_branch
        %1655 = sbr.rel (%p1653) target = $region88
      $region87: #{tpu_custom_call.1} parent=5 // pred_region
        %s1656 = ssub.s32 %s24, 2
        // Predicated region
        $region89: #{tpu_custom_call.1} parent=87 // pred_check
          %p1657 = pneg %p362
        $region90: #{tpu_custom_call.1} parent=87 // pred_check_branch
          %1659 = sbr.rel (%p1657) target = $region92
        $region91: #{tpu_custom_call.1} parent=87 // pred_region
          %s1660 = sand.u32 %s347, 1
          %s1661 = scalar_lea.sflag [#allocation6], %s1660
          %s1662 = sand.u32 %s347, 1
          %s1663 = smul.addr %s1662, 32
          %s1664 = scalar_lea.vmem [#allocation7], %s1663
          %1665 = dma.done %s1661, 512
        $region92: #{tpu_custom_call.1} parent=87 // pred_fallthru
          _
      $region88: #{tpu_custom_call.1} parent=5 // pred_fallthru
        _
    $region6: #{tpu_custom_call.1} parent=1 // loop_footer
      %s28 = sadd.s32 1, %s24
    $region7: #{tpu_custom_call.1} parent=1 // loop_footer_branch
      %23 = sbr.rel target = $region3
    $region8: #{tpu_custom_call.1} parent=1 // loop_exit
      _
    %1666 = vsyncpa [#allocation5], 1
    %s1667 = scalar_lea.sflag [#allocation5], 1
    %1668 = vsyncpa %s1667, 1
    %1669 = vsyncpa [#allocation6], 1
    %s1670 = scalar_lea.sflag [#allocation6], 1
    %1671 = vsyncpa %s1670, 1

</llo_original>
